<compile_context>
chip_gen: v6e
topology: v6e:2x2x1
jax: 0.10.0
libtpu: 0.0.40
codegen_flags: <defaults>
</compile_context>

<pallas_src>
import jax
import jax.numpy as jnp
from jax.experimental import pallas as pl
from jax.experimental.pallas import tpu as pltpu


def lstm_classifier_kernel(idx_ref, wslab_ref, lab_ref, state_ref, out_ref):
    """idx_ref:   (seq, 1) int32   token ids
       wslab_ref: (Vp+Hp, 4Hp) f32 rows [0,Vp): per-token projection table
                                   (embedding @ W_ih^T + b_ih + b_hh, gate order [i,f,o,g],
                                    each gate lane-padded to Hp); rows [Vp,Vp+Hp): W_hh^T padded
       lab_ref:   (8+Hp, Lp) f32   row 0: hidden2label bias (-1e30 on pad lanes),
                                   rows [8, 8+Hp): W_label^T padded
       state_ref: (8, Hp) f32      row 0: h0, row 1: c0 (pad lanes zero)
       out_ref:   (1, Lp) f32      log-softmax output (pad lanes ~ -inf)
    """
    seq = idx_ref.shape[0]
    Hp = state_ref.shape[1]
    Vp = wslab_ref.shape[0] - Hp

    # --- embedding gather + input projection in one MXU pass (hoisted out of loop) ---
    ids = idx_ref[...]                                                    # (seq, 1) int32
    lane_ids = jax.lax.broadcasted_iota(jnp.int32, (seq, Vp), 1)          # (seq, Vp)
    onehot = jnp.where(lane_ids == ids, 1.0, 0.0).astype(jnp.float32)     # (seq, Vp)
    xproj = jnp.dot(onehot, wslab_ref[0:Vp, :],
                    preferred_element_type=jnp.float32)                   # (seq, 4Hp), bias folded

    # Stationary hidden->hidden weights (bound once; reused by every step's dot).
    whh = wslab_ref[Vp:Vp + Hp, :]                                        # (Hp, 4Hp)

    st = state_ref[...]
    h = st[0:1, :]                                                        # (1, Hp)
    c = st[1:2, :]                                                        # (1, Hp)

    # Fully unrolled recurrence; per-step critical path is h@W_hh + add + gate math.
    for t in range(seq):
        gates = xproj[t:t + 1, :] + jnp.dot(h, whh,
                                            preferred_element_type=jnp.float32)  # (1, 4Hp)
        # Gate order [i, f, o, g]: one sigmoid over 3 aligned vregs, one tanh over the last.
        sig = jax.nn.sigmoid(gates[:, :3 * Hp])
        i_g = sig[:, 0 * Hp:1 * Hp]
        f_g = sig[:, 1 * Hp:2 * Hp]
        o_g = sig[:, 2 * Hp:3 * Hp]
        g_g = jnp.tanh(gates[:, 3 * Hp:])
        c = f_g * c + i_g * g_g
        h = o_g * jnp.tanh(c)

    # Final linear layer (lane-dense, padded label dim) + stable log_softmax.
    bl = lab_ref[0:1, :]                                                  # (1, Lp)
    wl = lab_ref[8:8 + Hp, :]                                             # (Hp, Lp)
    logits = jnp.dot(h, wl, preferred_element_type=jnp.float32) + bl      # (1, Lp)
    m = jnp.max(logits, axis=1, keepdims=True)
    shifted = logits - m
    lse = jnp.log(jnp.sum(jnp.exp(shifted), axis=1, keepdims=True))
    out_ref[...] = shifted - lse


def _pad_gate_cols(w, H, Hp):
    """(rows, 4H) in gate order [i,f,o,g] -> (rows, 4Hp), each gate at a 128-aligned lane group."""
    rows = w.shape[0]
    out = jnp.zeros((rows, 4 * Hp), jnp.float32)
    for k in range(4):
        out = out.at[:, k * Hp:k * Hp + H].set(w[:, k * H:(k + 1) * H])
    return out


def prepare_params(params):
    """One-time weight prep (permute / transpose / pad / fold).  NOT on the per-call path."""
    H = params["w_hh"].shape[1]
    V, E = params["embedding"].shape
    L = params["b_label"].shape[0]
    Hp = max(128, pl.cdiv(H, 128) * 128)
    Lp = max(128, pl.cdiv(L, 128) * 128)
    Vp = max(128, pl.cdiv(V, 128) * 128)

    def reorder(w):  # PyTorch gate order [i, f, g, o] -> [i, f, o, g]
        return jnp.concatenate(
            [w[0 * H:1 * H], w[1 * H:2 * H], w[3 * H:4 * H], w[2 * H:3 * H]], axis=0)

    wih_t = reorder(params["w_ih"].astype(jnp.float32)).T                  # (E, 4H)
    whh_t = reorder(params["w_hh"].astype(jnp.float32)).T                  # (H, 4H)
    b = reorder((params["b_ih"] + params["b_hh"]).astype(jnp.float32)).reshape(1, 4 * H)

    wih_p = _pad_gate_cols(wih_t, H, Hp)                                   # (E, 4Hp)
    b_p = _pad_gate_cols(b, H, Hp)                                         # (1, 4Hp)
    whh_p = jnp.zeros((Hp, 4 * Hp), jnp.float32).at[:H, :].set(
        _pad_gate_cols(whh_t, H, Hp))                                      # (Hp, 4Hp)

    # Per-token projection table: x_t @ W_ih^T + b  ==  proj[token_id]  (bias folded in).
    proj = params["embedding"].astype(jnp.float32) @ wih_p + b_p           # (V, 4Hp)
    proj_p = jnp.zeros((Vp, 4 * Hp), jnp.float32).at[:V, :].set(proj)      # (Vp, 4Hp)

    wslab = jnp.concatenate([proj_p, whh_p], axis=0)                       # (Vp+Hp, 4Hp)

    wl_p = jnp.zeros((Hp, Lp), jnp.float32).at[:H, :L].set(
        params["w_label"].astype(jnp.float32).T)                           # (Hp, Lp)
    bl = jnp.full((1, Lp), -1e30, jnp.float32).at[0, :L].set(
        params["b_label"].astype(jnp.float32))                             # (1, Lp)
    lab = (jnp.zeros((8 + Hp, Lp), jnp.float32)
           .at[0:1, :].set(bl)
           .at[8:, :].set(wl_p))                                           # (8+Hp, Lp)

    state = jnp.zeros((8, Hp), jnp.float32)
    state = state.at[0, :H].set(params["h0"].astype(jnp.float32).reshape(-1))
    state = state.at[1, :H].set(params["c0"].astype(jnp.float32).reshape(-1))

    return {"wslab": wslab, "lab": lab, "state": state, "Lp": Lp, "L": L}


def lstm_classifier_forward(indices, prep):
    """indices: (seq,) int32 token ids. Returns (1, label_size) log-probs."""
    seq = indices.shape[0]
    Lp, L = prep["Lp"], prep["L"]
    idx = indices.astype(jnp.int32).reshape(seq, 1)

    vmem_spec = pl.BlockSpec(memory_space=pltpu.MemorySpace.VMEM)
    out_padded = pl.pallas_call(
        lstm_classifier_kernel,
        out_shape=jax.ShapeDtypeStruct((1, Lp), jnp.float32),
        in_specs=[vmem_spec] * 4,
        out_specs=vmem_spec,
    )(idx, prep["wslab"], prep["lab"], prep["state"])

    return out_padded[:, :L]


def reference_forward(indices, params):
    """Pure-JAX reference matching the PyTorch module (gate order [i, f, g, o])."""
    emb = params["embedding"][indices].astype(jnp.float32)
    H = params["w_hh"].shape[1]
    w_ih, w_hh = params["w_ih"], params["w_hh"]
    b = params["b_ih"] + params["b_hh"]
    h = params["h0"].reshape(1, -1)
    c = params["c0"].reshape(1, -1)
    for t in range(emb.shape[0]):
        g = emb[t:t + 1] @ w_ih.T + h @ w_hh.T + b
        i = jax.nn.sigmoid(g[:, 0 * H:1 * H])
        f = jax.nn.sigmoid(g[:, 1 * H:2 * H])
        gg = jnp.tanh(g[:, 2 * H:3 * H])
        o = jax.nn.sigmoid(g[:, 3 * H:4 * H])
        c = f * c + i * gg
        h = o * jnp.tanh(c)
    logits = h @ params["w_label"].T + params["b_label"]
    return jax.nn.log_softmax(logits, axis=1)


def init_params(key, vocab_size, embedding_dim, hidden_dim, label_size):
    ks = jax.random.split(key, 9)
    scale = 1.0 / jnp.sqrt(hidden_dim)
    return {
        "embedding": jax.random.normal(ks[0], (vocab_size, embedding_dim), jnp.float32),
        "w_ih": jax.random.uniform(ks[1], (4 * hidden_dim, embedding_dim),
                                   jnp.float32, -scale, scale),
        "w_hh": jax.random.uniform(ks[2], (4 * hidden_dim, hidden_dim),
                                   jnp.float32, -scale, scale),
        "b_ih": jax.random.uniform(ks[3], (4 * hidden_dim,), jnp.float32, -scale, scale),
        "b_hh": jax.random.uniform(ks[4], (4 * hidden_dim,), jnp.float32, -scale, scale),
        "w_label": jax.random.uniform(ks[5], (label_size, hidden_dim),
                                      jnp.float32, -scale, scale),
        "b_label": jax.random.uniform(ks[6], (label_size,), jnp.float32, -scale, scale),
        # module's init_hidden() uses torch.randn(1, 1, H) for (h0, c0)
        "h0": jax.random.normal(ks[7], (hidden_dim,), jnp.float32),
        "c0": jax.random.normal(ks[8], (hidden_dim,), jnp.float32),
    }


if __name__ == "__main__":
    embedding_dim = 16
    hidden_dim = 32
    vocab_size = 50
    label_size = 4
    seq_len = 8

    key = jax.random.PRNGKey(0)
    pkey, ikey = jax.random.split(key)
    params = init_params(pkey, vocab_size, embedding_dim, hidden_dim, label_size)
    indices = jax.random.randint(ikey, (seq_len,), 0, vocab_size, dtype=jnp.int32)

    prep = prepare_params(params)          # one-time prep, off the per-inference path
    log_probs = lstm_classifier_forward(indices, prep)
    jax.block_until_ready(log_probs)

    assert log_probs.shape == (1, label_size)
    # log_softmax rows must (approximately) sum to 1 in prob space
    assert jnp.allclose(jnp.sum(jnp.exp(log_probs), axis=1), 1.0, atol=1e-4)
    # match the pure-JAX reference (MXU default-precision f32 matmuls -> modest tolerance)
    ref = reference_forward(indices, params)
    assert jnp.allclose(log_probs, ref, atol=5e-2)
    print("KERNEL_OK")
</pallas_src>

<mosaic_0001>
module attributes {stable_mosaic.version = 11 : i64} {
  func.func @lstm_classifier_kernel(%arg0: memref<8x1xi32, #tpu.memory_space<vmem>>, %arg1: memref<256x512xf32, #tpu.memory_space<vmem>>, %arg2: memref<136x128xf32, #tpu.memory_space<vmem>>, %arg3: memref<8x128xf32, #tpu.memory_space<vmem>>, %arg4: memref<1x128xf32, #tpu.memory_space<vmem>>) attributes {dimension_semantics = [], scalar_prefetch = 0 : i64, scratch_operands = 0 : i64, tpu.core_type = #tpu.core_type<tc>} {
    %c0 = arith.constant 0 : index
    %c0_0 = arith.constant 0 : index
    %0 = vector.load %arg0[%c0, %c0_0] : memref<8x1xi32, #tpu.memory_space<vmem>>, vector<8x1xi32>
    %1 = tpu.iota {dimensions = array<i32: 1>} : vector<8x128xi32>
    %2 = vector.broadcast %0 : vector<8x1xi32> to vector<8x128xi32>
    %3 = arith.cmpi eq, %1, %2 : vector<8x128xi32>
    %cst = arith.constant 1.000000e+00 : f32
    %cst_1 = arith.constant 0.000000e+00 : f32
    %4 = vector.broadcast %cst : f32 to vector<8x128xf32>
    %5 = vector.broadcast %cst_1 : f32 to vector<8x128xf32>
    %6 = arith.select %3, %4, %5 : vector<8x128xi1>, vector<8x128xf32>
    %c0_2 = arith.constant 0 : index
    %c0_3 = arith.constant 0 : index
    %7 = vector.load %arg1[%c0_2, %c0_3] : memref<256x512xf32, #tpu.memory_space<vmem>>, vector<128x512xf32>
    %cst_4 = arith.constant dense<0.000000e+00> : vector<8x512xf32>
    %8 = tpu.matmul %6, %7, %cst_4 {dimension_numbers = #tpu.dot_dimension_numbers<[1], [0], [0], [1], [0, 0, 1, 1], [], []>} : vector<8x128xf32>, vector<128x512xf32>, vector<8x512xf32> -> vector<8x512xf32>
    %c128 = arith.constant 128 : index
    %c0_5 = arith.constant 0 : index
    %9 = vector.load %arg1[%c128, %c0_5] : memref<256x512xf32, #tpu.memory_space<vmem>>, vector<128x512xf32>
    %c0_6 = arith.constant 0 : index
    %c0_7 = arith.constant 0 : index
    %10 = vector.load %arg3[%c0_6, %c0_7] : memref<8x128xf32, #tpu.memory_space<vmem>>, vector<8x128xf32>
    %11 = vector.extract_strided_slice %10 {offsets = [0, 0], sizes = [1, 128], strides = [1, 1]} : vector<8x128xf32> to vector<1x128xf32>
    %12 = vector.extract_strided_slice %10 {offsets = [1, 0], sizes = [1, 128], strides = [1, 1]} : vector<8x128xf32> to vector<1x128xf32>
    %13 = vector.extract_strided_slice %8 {offsets = [0, 0], sizes = [1, 512], strides = [1, 1]} : vector<8x512xf32> to vector<1x512xf32>
    %cst_8 = arith.constant dense<0.000000e+00> : vector<1x512xf32>
    %14 = tpu.matmul %11, %9, %cst_8 {dimension_numbers = #tpu.dot_dimension_numbers<[1], [0], [0], [1], [0, 0, 1, 1], [], []>} : vector<1x128xf32>, vector<128x512xf32>, vector<1x512xf32> -> vector<1x512xf32>
    %15 = arith.addf %13, %14 : vector<1x512xf32>
    %16 = vector.extract_strided_slice %15 {offsets = [0, 0], sizes = [1, 384], strides = [1, 1]} : vector<1x512xf32> to vector<1x384xf32>
    %17 = arith.negf %16 : vector<1x384xf32>
    %18 = math.exp %17 : vector<1x384xf32>
    %cst_9 = arith.constant 1.000000e+00 : f32
    %19 = vector.broadcast %cst_9 : f32 to vector<1x384xf32>
    %20 = arith.addf %19, %18 : vector<1x384xf32>
    %21 = arith.divf %19, %20 : vector<1x384xf32>
    %22 = vector.extract_strided_slice %21 {offsets = [0, 0], sizes = [1, 128], strides = [1, 1]} : vector<1x384xf32> to vector<1x128xf32>
    %23 = vector.extract_strided_slice %21 {offsets = [0, 128], sizes = [1, 128], strides = [1, 1]} : vector<1x384xf32> to vector<1x128xf32>
    %24 = vector.extract_strided_slice %21 {offsets = [0, 256], sizes = [1, 128], strides = [1, 1]} : vector<1x384xf32> to vector<1x128xf32>
    %25 = vector.extract_strided_slice %15 {offsets = [0, 384], sizes = [1, 128], strides = [1, 1]} : vector<1x512xf32> to vector<1x128xf32>
    %26 = math.tanh %25 : vector<1x128xf32>
    %27 = arith.mulf %23, %12 : vector<1x128xf32>
    %28 = arith.mulf %22, %26 : vector<1x128xf32>
    %29 = arith.addf %27, %28 : vector<1x128xf32>
    %30 = math.tanh %29 : vector<1x128xf32>
    %31 = arith.mulf %24, %30 : vector<1x128xf32>
    %32 = vector.extract_strided_slice %8 {offsets = [1, 0], sizes = [1, 512], strides = [1, 1]} : vector<8x512xf32> to vector<1x512xf32>
    %cst_10 = arith.constant dense<0.000000e+00> : vector<1x512xf32>
    %33 = tpu.matmul %31, %9, %cst_10 {dimension_numbers = #tpu.dot_dimension_numbers<[1], [0], [0], [1], [0, 0, 1, 1], [], []>} : vector<1x128xf32>, vector<128x512xf32>, vector<1x512xf32> -> vector<1x512xf32>
    %34 = arith.addf %32, %33 : vector<1x512xf32>
    %35 = vector.extract_strided_slice %34 {offsets = [0, 0], sizes = [1, 384], strides = [1, 1]} : vector<1x512xf32> to vector<1x384xf32>
    %36 = arith.negf %35 : vector<1x384xf32>
    %37 = math.exp %36 : vector<1x384xf32>
    %cst_11 = arith.constant 1.000000e+00 : f32
    %38 = vector.broadcast %cst_11 : f32 to vector<1x384xf32>
    %39 = arith.addf %38, %37 : vector<1x384xf32>
    %40 = arith.divf %38, %39 : vector<1x384xf32>
    %41 = vector.extract_strided_slice %40 {offsets = [0, 0], sizes = [1, 128], strides = [1, 1]} : vector<1x384xf32> to vector<1x128xf32>
    %42 = vector.extract_strided_slice %40 {offsets = [0, 128], sizes = [1, 128], strides = [1, 1]} : vector<1x384xf32> to vector<1x128xf32>
    %43 = vector.extract_strided_slice %40 {offsets = [0, 256], sizes = [1, 128], strides = [1, 1]} : vector<1x384xf32> to vector<1x128xf32>
    %44 = vector.extract_strided_slice %34 {offsets = [0, 384], sizes = [1, 128], strides = [1, 1]} : vector<1x512xf32> to vector<1x128xf32>
    %45 = math.tanh %44 : vector<1x128xf32>
    %46 = arith.mulf %42, %29 : vector<1x128xf32>
    %47 = arith.mulf %41, %45 : vector<1x128xf32>
    %48 = arith.addf %46, %47 : vector<1x128xf32>
    %49 = math.tanh %48 : vector<1x128xf32>
    %50 = arith.mulf %43, %49 : vector<1x128xf32>
    %51 = vector.extract_strided_slice %8 {offsets = [2, 0], sizes = [1, 512], strides = [1, 1]} : vector<8x512xf32> to vector<1x512xf32>
    %cst_12 = arith.constant dense<0.000000e+00> : vector<1x512xf32>
    %52 = tpu.matmul %50, %9, %cst_12 {dimension_numbers = #tpu.dot_dimension_numbers<[1], [0], [0], [1], [0, 0, 1, 1], [], []>} : vector<1x128xf32>, vector<128x512xf32>, vector<1x512xf32> -> vector<1x512xf32>
    %53 = arith.addf %51, %52 : vector<1x512xf32>
    %54 = vector.extract_strided_slice %53 {offsets = [0, 0], sizes = [1, 384], strides = [1, 1]} : vector<1x512xf32> to vector<1x384xf32>
    %55 = arith.negf %54 : vector<1x384xf32>
    %56 = math.exp %55 : vector<1x384xf32>
    %cst_13 = arith.constant 1.000000e+00 : f32
    %57 = vector.broadcast %cst_13 : f32 to vector<1x384xf32>
    %58 = arith.addf %57, %56 : vector<1x384xf32>
    %59 = arith.divf %57, %58 : vector<1x384xf32>
    %60 = vector.extract_strided_slice %59 {offsets = [0, 0], sizes = [1, 128], strides = [1, 1]} : vector<1x384xf32> to vector<1x128xf32>
    %61 = vector.extract_strided_slice %59 {offsets = [0, 128], sizes = [1, 128], strides = [1, 1]} : vector<1x384xf32> to vector<1x128xf32>
    %62 = vector.extract_strided_slice %59 {offsets = [0, 256], sizes = [1, 128], strides = [1, 1]} : vector<1x384xf32> to vector<1x128xf32>
    %63 = vector.extract_strided_slice %53 {offsets = [0, 384], sizes = [1, 128], strides = [1, 1]} : vector<1x512xf32> to vector<1x128xf32>
    %64 = math.tanh %63 : vector<1x128xf32>
    %65 = arith.mulf %61, %48 : vector<1x128xf32>
    %66 = arith.mulf %60, %64 : vector<1x128xf32>
    %67 = arith.addf %65, %66 : vector<1x128xf32>
    %68 = math.tanh %67 : vector<1x128xf32>
    %69 = arith.mulf %62, %68 : vector<1x128xf32>
    %70 = vector.extract_strided_slice %8 {offsets = [3, 0], sizes = [1, 512], strides = [1, 1]} : vector<8x512xf32> to vector<1x512xf32>
    %cst_14 = arith.constant dense<0.000000e+00> : vector<1x512xf32>
    %71 = tpu.matmul %69, %9, %cst_14 {dimension_numbers = #tpu.dot_dimension_numbers<[1], [0], [0], [1], [0, 0, 1, 1], [], []>} : vector<1x128xf32>, vector<128x512xf32>, vector<1x512xf32> -> vector<1x512xf32>
    %72 = arith.addf %70, %71 : vector<1x512xf32>
    %73 = vector.extract_strided_slice %72 {offsets = [0, 0], sizes = [1, 384], strides = [1, 1]} : vector<1x512xf32> to vector<1x384xf32>
    %74 = arith.negf %73 : vector<1x384xf32>
    %75 = math.exp %74 : vector<1x384xf32>
    %cst_15 = arith.constant 1.000000e+00 : f32
    %76 = vector.broadcast %cst_15 : f32 to vector<1x384xf32>
    %77 = arith.addf %76, %75 : vector<1x384xf32>
    %78 = arith.divf %76, %77 : vector<1x384xf32>
    %79 = vector.extract_strided_slice %78 {offsets = [0, 0], sizes = [1, 128], strides = [1, 1]} : vector<1x384xf32> to vector<1x128xf32>
    %80 = vector.extract_strided_slice %78 {offsets = [0, 128], sizes = [1, 128], strides = [1, 1]} : vector<1x384xf32> to vector<1x128xf32>
    %81 = vector.extract_strided_slice %78 {offsets = [0, 256], sizes = [1, 128], strides = [1, 1]} : vector<1x384xf32> to vector<1x128xf32>
    %82 = vector.extract_strided_slice %72 {offsets = [0, 384], sizes = [1, 128], strides = [1, 1]} : vector<1x512xf32> to vector<1x128xf32>
    %83 = math.tanh %82 : vector<1x128xf32>
    %84 = arith.mulf %80, %67 : vector<1x128xf32>
    %85 = arith.mulf %79, %83 : vector<1x128xf32>
    %86 = arith.addf %84, %85 : vector<1x128xf32>
    %87 = math.tanh %86 : vector<1x128xf32>
    %88 = arith.mulf %81, %87 : vector<1x128xf32>
    %89 = vector.extract_strided_slice %8 {offsets = [4, 0], sizes = [1, 512], strides = [1, 1]} : vector<8x512xf32> to vector<1x512xf32>
    %cst_16 = arith.constant dense<0.000000e+00> : vector<1x512xf32>
    %90 = tpu.matmul %88, %9, %cst_16 {dimension_numbers = #tpu.dot_dimension_numbers<[1], [0], [0], [1], [0, 0, 1, 1], [], []>} : vector<1x128xf32>, vector<128x512xf32>, vector<1x512xf32> -> vector<1x512xf32>
    %91 = arith.addf %89, %90 : vector<1x512xf32>
    %92 = vector.extract_strided_slice %91 {offsets = [0, 0], sizes = [1, 384], strides = [1, 1]} : vector<1x512xf32> to vector<1x384xf32>
    %93 = arith.negf %92 : vector<1x384xf32>
    %94 = math.exp %93 : vector<1x384xf32>
    %cst_17 = arith.constant 1.000000e+00 : f32
    %95 = vector.broadcast %cst_17 : f32 to vector<1x384xf32>
    %96 = arith.addf %95, %94 : vector<1x384xf32>
    %97 = arith.divf %95, %96 : vector<1x384xf32>
    %98 = vector.extract_strided_slice %97 {offsets = [0, 0], sizes = [1, 128], strides = [1, 1]} : vector<1x384xf32> to vector<1x128xf32>
    %99 = vector.extract_strided_slice %97 {offsets = [0, 128], sizes = [1, 128], strides = [1, 1]} : vector<1x384xf32> to vector<1x128xf32>
    %100 = vector.extract_strided_slice %97 {offsets = [0, 256], sizes = [1, 128], strides = [1, 1]} : vector<1x384xf32> to vector<1x128xf32>
    %101 = vector.extract_strided_slice %91 {offsets = [0, 384], sizes = [1, 128], strides = [1, 1]} : vector<1x512xf32> to vector<1x128xf32>
    %102 = math.tanh %101 : vector<1x128xf32>
    %103 = arith.mulf %99, %86 : vector<1x128xf32>
    %104 = arith.mulf %98, %102 : vector<1x128xf32>
    %105 = arith.addf %103, %104 : vector<1x128xf32>
    %106 = math.tanh %105 : vector<1x128xf32>
    %107 = arith.mulf %100, %106 : vector<1x128xf32>
    %108 = vector.extract_strided_slice %8 {offsets = [5, 0], sizes = [1, 512], strides = [1, 1]} : vector<8x512xf32> to vector<1x512xf32>
    %cst_18 = arith.constant dense<0.000000e+00> : vector<1x512xf32>
    %109 = tpu.matmul %107, %9, %cst_18 {dimension_numbers = #tpu.dot_dimension_numbers<[1], [0], [0], [1], [0, 0, 1, 1], [], []>} : vector<1x128xf32>, vector<128x512xf32>, vector<1x512xf32> -> vector<1x512xf32>
    %110 = arith.addf %108, %109 : vector<1x512xf32>
    %111 = vector.extract_strided_slice %110 {offsets = [0, 0], sizes = [1, 384], strides = [1, 1]} : vector<1x512xf32> to vector<1x384xf32>
    %112 = arith.negf %111 : vector<1x384xf32>
    %113 = math.exp %112 : vector<1x384xf32>
    %cst_19 = arith.constant 1.000000e+00 : f32
    %114 = vector.broadcast %cst_19 : f32 to vector<1x384xf32>
    %115 = arith.addf %114, %113 : vector<1x384xf32>
    %116 = arith.divf %114, %115 : vector<1x384xf32>
    %117 = vector.extract_strided_slice %116 {offsets = [0, 0], sizes = [1, 128], strides = [1, 1]} : vector<1x384xf32> to vector<1x128xf32>
    %118 = vector.extract_strided_slice %116 {offsets = [0, 128], sizes = [1, 128], strides = [1, 1]} : vector<1x384xf32> to vector<1x128xf32>
    %119 = vector.extract_strided_slice %116 {offsets = [0, 256], sizes = [1, 128], strides = [1, 1]} : vector<1x384xf32> to vector<1x128xf32>
    %120 = vector.extract_strided_slice %110 {offsets = [0, 384], sizes = [1, 128], strides = [1, 1]} : vector<1x512xf32> to vector<1x128xf32>
    %121 = math.tanh %120 : vector<1x128xf32>
    %122 = arith.mulf %118, %105 : vector<1x128xf32>
    %123 = arith.mulf %117, %121 : vector<1x128xf32>
    %124 = arith.addf %122, %123 : vector<1x128xf32>
    %125 = math.tanh %124 : vector<1x128xf32>
    %126 = arith.mulf %119, %125 : vector<1x128xf32>
    %127 = vector.extract_strided_slice %8 {offsets = [6, 0], sizes = [1, 512], strides = [1, 1]} : vector<8x512xf32> to vector<1x512xf32>
    %cst_20 = arith.constant dense<0.000000e+00> : vector<1x512xf32>
    %128 = tpu.matmul %126, %9, %cst_20 {dimension_numbers = #tpu.dot_dimension_numbers<[1], [0], [0], [1], [0, 0, 1, 1], [], []>} : vector<1x128xf32>, vector<128x512xf32>, vector<1x512xf32> -> vector<1x512xf32>
    %129 = arith.addf %127, %128 : vector<1x512xf32>
    %130 = vector.extract_strided_slice %129 {offsets = [0, 0], sizes = [1, 384], strides = [1, 1]} : vector<1x512xf32> to vector<1x384xf32>
    %131 = arith.negf %130 : vector<1x384xf32>
    %132 = math.exp %131 : vector<1x384xf32>
    %cst_21 = arith.constant 1.000000e+00 : f32
    %133 = vector.broadcast %cst_21 : f32 to vector<1x384xf32>
    %134 = arith.addf %133, %132 : vector<1x384xf32>
    %135 = arith.divf %133, %134 : vector<1x384xf32>
    %136 = vector.extract_strided_slice %135 {offsets = [0, 0], sizes = [1, 128], strides = [1, 1]} : vector<1x384xf32> to vector<1x128xf32>
    %137 = vector.extract_strided_slice %135 {offsets = [0, 128], sizes = [1, 128], strides = [1, 1]} : vector<1x384xf32> to vector<1x128xf32>
    %138 = vector.extract_strided_slice %135 {offsets = [0, 256], sizes = [1, 128], strides = [1, 1]} : vector<1x384xf32> to vector<1x128xf32>
    %139 = vector.extract_strided_slice %129 {offsets = [0, 384], sizes = [1, 128], strides = [1, 1]} : vector<1x512xf32> to vector<1x128xf32>
    %140 = math.tanh %139 : vector<1x128xf32>
    %141 = arith.mulf %137, %124 : vector<1x128xf32>
    %142 = arith.mulf %136, %140 : vector<1x128xf32>
    %143 = arith.addf %141, %142 : vector<1x128xf32>
    %144 = math.tanh %143 : vector<1x128xf32>
    %145 = arith.mulf %138, %144 : vector<1x128xf32>
    %146 = vector.extract_strided_slice %8 {offsets = [7, 0], sizes = [1, 512], strides = [1, 1]} : vector<8x512xf32> to vector<1x512xf32>
    %cst_22 = arith.constant dense<0.000000e+00> : vector<1x512xf32>
    %147 = tpu.matmul %145, %9, %cst_22 {dimension_numbers = #tpu.dot_dimension_numbers<[1], [0], [0], [1], [0, 0, 1, 1], [], []>} : vector<1x128xf32>, vector<128x512xf32>, vector<1x512xf32> -> vector<1x512xf32>
    %148 = arith.addf %146, %147 : vector<1x512xf32>
    %149 = vector.extract_strided_slice %148 {offsets = [0, 0], sizes = [1, 384], strides = [1, 1]} : vector<1x512xf32> to vector<1x384xf32>
    %150 = arith.negf %149 : vector<1x384xf32>
    %151 = math.exp %150 : vector<1x384xf32>
    %cst_23 = arith.constant 1.000000e+00 : f32
    %152 = vector.broadcast %cst_23 : f32 to vector<1x384xf32>
    %153 = arith.addf %152, %151 : vector<1x384xf32>
    %154 = arith.divf %152, %153 : vector<1x384xf32>
    %155 = vector.extract_strided_slice %154 {offsets = [0, 0], sizes = [1, 128], strides = [1, 1]} : vector<1x384xf32> to vector<1x128xf32>
    %156 = vector.extract_strided_slice %154 {offsets = [0, 128], sizes = [1, 128], strides = [1, 1]} : vector<1x384xf32> to vector<1x128xf32>
    %157 = vector.extract_strided_slice %154 {offsets = [0, 256], sizes = [1, 128], strides = [1, 1]} : vector<1x384xf32> to vector<1x128xf32>
    %158 = vector.extract_strided_slice %148 {offsets = [0, 384], sizes = [1, 128], strides = [1, 1]} : vector<1x512xf32> to vector<1x128xf32>
    %159 = math.tanh %158 : vector<1x128xf32>
    %160 = arith.mulf %156, %143 : vector<1x128xf32>
    %161 = arith.mulf %155, %159 : vector<1x128xf32>
    %162 = arith.addf %160, %161 : vector<1x128xf32>
    %163 = math.tanh %162 : vector<1x128xf32>
    %164 = arith.mulf %157, %163 : vector<1x128xf32>
    %c0_24 = arith.constant 0 : index
    %c0_25 = arith.constant 0 : index
    %165 = vector.load %arg2[%c0_24, %c0_25] : memref<136x128xf32, #tpu.memory_space<vmem>>, vector<1x128xf32>
    %c8 = arith.constant 8 : index
    %c0_26 = arith.constant 0 : index
    %166 = vector.load %arg2[%c8, %c0_26] : memref<136x128xf32, #tpu.memory_space<vmem>>, vector<128x128xf32>
    %cst_27 = arith.constant dense<0.000000e+00> : vector<1x128xf32>
    %167 = tpu.matmul %164, %166, %cst_27 {dimension_numbers = #tpu.dot_dimension_numbers<[1], [0], [0], [1], [0, 0, 1, 1], [], []>} : vector<1x128xf32>, vector<128x128xf32>, vector<1x128xf32> -> vector<1x128xf32>
    %168 = arith.addf %167, %165 : vector<1x128xf32>
    %cst_28 = arith.constant dense<0xFF800000> : vector<1xf32>
    %169 = vector.multi_reduction <maximumf>, %168, %cst_28 [1] : vector<1x128xf32> to vector<1xf32>
    %170 = vector.shape_cast %169 : vector<1xf32> to vector<1x1xf32>
    %171 = vector.broadcast %170 : vector<1x1xf32> to vector<1x128xf32>
    %172 = arith.subf %168, %171 : vector<1x128xf32>
    %173 = math.exp %172 : vector<1x128xf32>
    %cst_29 = arith.constant dense<0.000000e+00> : vector<1xf32>
    %174 = vector.multi_reduction <add>, %173, %cst_29 [1] : vector<1x128xf32> to vector<1xf32>
    %175 = vector.shape_cast %174 : vector<1xf32> to vector<1x1xf32>
    %176 = math.log %175 : vector<1x1xf32>
    %177 = vector.broadcast %176 : vector<1x1xf32> to vector<1x128xf32>
    %178 = arith.subf %172, %177 : vector<1x128xf32>
    %c0_30 = arith.constant 0 : index
    %c0_31 = arith.constant 0 : index
    %179 = vector.load %arg4[%c0_30, %c0_31] : memref<1x128xf32, #tpu.memory_space<vmem>>, vector<1x128xf32>
    tpu.vector_store %arg4[%c0_30, %c0_31], %178 {strides = array<i32>} : memref<1x128xf32, #tpu.memory_space<vmem>>, vector<1x128xf32>,
    return
  }
}

</mosaic_0001>

<llo_original>
// kernel: tpu_custom_call.1
$region0: #{tpu_custom_call.1}
  #allocation0 [shape = 'u32[]', space=smem, size = 0x4, offset = 0x4, fixed_abs, tag = 'smem constant byte address 0x4 - core index']
  #allocation1 [shape = 'u32[144,128]{1,0:T(1,128)}', space=vmem, size = 0x12000, scoped, tag = 'internal scratch']
  %s0 = inlined_call_operand.vmem [shape: s32[8,1], index: 0, kind: input, shape index: {}]
  %s1 = inlined_call_operand.hbm [shape: f32[256,512], index: 1, kind: input, shape index: {}]
  %s2 = inlined_call_operand.hbm [shape: f32[136,128], index: 2, kind: input, shape index: {}]
  %s3 = inlined_call_operand.vmem [shape: f32[8,128], index: 3, kind: input, shape index: {}]
  %s4 = inlined_call_operand.hbm [shape: f32[1,128], index: 4, kind: output, shape index: {}]
  %s5 = sld [smem:[#allocation0]]
  $region34: #{tpu_custom_call.1} parent=0
    _
  %s7 = ssub.s32 1, %s5
  %s8 = scalar_select 0, %s7, %s5
  $region1: #{tpu_custom_call.1} parent=0
    #allocation2 [shape = 'u8[524288]{0}', space=vmem, size = 0x80000, scoped, tag = 'input window, operand 1, single buffered']
    #allocation3 [shape = 's32[1]{0}', space=sflag, size = 0x4, scoped, tag = 'scoped memory for tpu_custom_call.1']
    #allocation4 [shape = 's32[1]{0}', space=sflag, size = 0x4, scoped, tag = 'scoped memory for tpu_custom_call.1']
    #allocation5 [shape = 'u8[69632]{0}', space=vmem, size = 0x11000, scoped, tag = 'input window, operand 2, single buffered']
    #allocation6 [shape = 's32[1]{0}', space=sflag, size = 0x4, scoped, tag = 'scoped memory for tpu_custom_call.1']
    #allocation7 [shape = 'u8[512]{0}', space=vmem, size = 0x400, scoped, tag = 'output window, operand 0, single buffered']
    %9 = vsyncpa [#allocation3], 0
    %10 = vsyncpa [#allocation6], 0
    %11 = vsyncpa [#allocation4], 0
    // Predicated region
    $region2: #{tpu_custom_call.1} parent=1 // pred_check
      _
    $region3: #{tpu_custom_call.1} parent=1 // pred_check_branch
      %13 = sbr.rel (0) target = $region5
    $region4: #{tpu_custom_call.1} parent=1 // pred_region
      _
    $region5: #{tpu_custom_call.1} parent=1 // pred_fallthru
      _
    // Predicated region
    $region6: #{tpu_custom_call.1} parent=1 // pred_check
      _
    $region7: #{tpu_custom_call.1} parent=1 // pred_check_branch
      %15 = sbr.rel (0) target = $region9
    $region8: #{tpu_custom_call.1} parent=1 // pred_region
      %s17 = ssub.s32 16384, 16384
      %18 = vsyncadd [#allocation3], %s17
      %s19 = sshll.u32 [#allocation2], 4
      %s20 = int_to_ptr.vmem [resolvable:$true] %s19
      %25 = dma.hbm_to_vmem [thread:$0]  %s1, 16384, %s20, [#allocation3], 512, 512, 32
    $region9: #{tpu_custom_call.1} parent=1 // pred_fallthru
      _
    // Predicated region
    $region10: #{tpu_custom_call.1} parent=1 // pred_check
      _
    $region11: #{tpu_custom_call.1} parent=1 // pred_check_branch
      %27 = sbr.rel (0) target = $region13
    $region12: #{tpu_custom_call.1} parent=1 // pred_region
      %s29 = ssub.s32 2176, 2176
      %30 = vsyncadd [#allocation6], %s29
      %s31 = sshll.u32 [#allocation5], 4
      %s32 = int_to_ptr.vmem [resolvable:$true] %s31
      %37 = dma.hbm_to_vmem [thread:$0]  %s2, 2176, %s32, [#allocation6], 128, 128, 8
    $region13: #{tpu_custom_call.1} parent=1 // pred_fallthru
      _
    // Predicated region
    $region14: #{tpu_custom_call.1} parent=1 // pred_check
      _
    $region15: #{tpu_custom_call.1} parent=1 // pred_check_branch
      %39 = sbr.rel (0) target = $region17
    $region16: #{tpu_custom_call.1} parent=1 // pred_region
      _
    $region17: #{tpu_custom_call.1} parent=1 // pred_fallthru
      _
    // Predicated region
    $region18: #{tpu_custom_call.1} parent=1 // pred_check
      _
    $region19: #{tpu_custom_call.1} parent=1 // pred_check_branch
      %41 = sbr.rel (0) target = $region21
    $region20: #{tpu_custom_call.1} parent=1 // pred_region
      %42 = dma.done [#allocation3], 16384
    $region21: #{tpu_custom_call.1} parent=1 // pred_fallthru
      _
    // Predicated region
    $region22: #{tpu_custom_call.1} parent=1 // pred_check
      _
    $region23: #{tpu_custom_call.1} parent=1 // pred_check_branch
      %44 = sbr.rel (0) target = $region25
    $region24: #{tpu_custom_call.1} parent=1 // pred_region
      %45 = dma.done [#allocation6], 2176
    $region25: #{tpu_custom_call.1} parent=1 // pred_fallthru
      _
    %v46 = vld [vmem:[%s0] sm:$0xff]
    %v47 = vlaneseq
    %v48 = vand.u32 %v47, 127
    %49 = vset.pattern.permute.xlu0 0
    %50 = vperm.xlu0 %49, %v46
    %v51 = vpop.permute.xlu0 %50
    %vm52 = vcmp.eq.s32.totalorder %v48, %v51
    %v53 = vsel %vm52, 1.0, 0.0
    %v54 = vld [vmem:[#allocation2] sm:$0xff]
    %v55 = vld [vmem:[#allocation2 + $0x8] sm:$0xff]
    %v56 = vld [vmem:[#allocation2 + $0x10] sm:$0xff]
    %v57 = vld [vmem:[#allocation2 + $0x18] sm:$0xff]
    %v58 = vld [vmem:[#allocation2 + $0x20] sm:$0xff]
    %v59 = vld [vmem:[#allocation2 + $0x28] sm:$0xff]
    %v60 = vld [vmem:[#allocation2 + $0x30] sm:$0xff]
    %v61 = vld [vmem:[#allocation2 + $0x38] sm:$0xff]
    %v62 = vld [vmem:[#allocation2 + $0x40] sm:$0xff]
    %v63 = vld [vmem:[#allocation2 + $0x48] sm:$0xff]
    %v64 = vld [vmem:[#allocation2 + $0x50] sm:$0xff]
    %v65 = vld [vmem:[#allocation2 + $0x58] sm:$0xff]
    %v66 = vld [vmem:[#allocation2 + $0x60] sm:$0xff]
    %v67 = vld [vmem:[#allocation2 + $0x68] sm:$0xff]
    %v68 = vld [vmem:[#allocation2 + $0x70] sm:$0xff]
    %v69 = vld [vmem:[#allocation2 + $0x78] sm:$0xff]
    %v70 = vld [vmem:[#allocation2 + $0x80] sm:$0xff]
    %v71 = vld [vmem:[#allocation2 + $0x88] sm:$0xff]
    %v72 = vld [vmem:[#allocation2 + $0x90] sm:$0xff]
    %v73 = vld [vmem:[#allocation2 + $0x98] sm:$0xff]
    %v74 = vld [vmem:[#allocation2 + $0xa0] sm:$0xff]
    %v75 = vld [vmem:[#allocation2 + $0xa8] sm:$0xff]
    %v76 = vld [vmem:[#allocation2 + $0xb0] sm:$0xff]
    %v77 = vld [vmem:[#allocation2 + $0xb8] sm:$0xff]
    %v78 = vld [vmem:[#allocation2 + $0xc0] sm:$0xff]
    %v79 = vld [vmem:[#allocation2 + $0xc8] sm:$0xff]
    %v80 = vld [vmem:[#allocation2 + $0xd0] sm:$0xff]
    %v81 = vld [vmem:[#allocation2 + $0xd8] sm:$0xff]
    %v82 = vld [vmem:[#allocation2 + $0xe0] sm:$0xff]
    %v83 = vld [vmem:[#allocation2 + $0xe8] sm:$0xff]
    %v84 = vld [vmem:[#allocation2 + $0xf0] sm:$0xff]
    %v85 = vld [vmem:[#allocation2 + $0xf8] sm:$0xff]
    %v86 = vld [vmem:[#allocation2 + $0x100] sm:$0xff]
    %v87 = vld [vmem:[#allocation2 + $0x108] sm:$0xff]
    %v88 = vld [vmem:[#allocation2 + $0x110] sm:$0xff]
    %v89 = vld [vmem:[#allocation2 + $0x118] sm:$0xff]
    %v90 = vld [vmem:[#allocation2 + $0x120] sm:$0xff]
    %v91 = vld [vmem:[#allocation2 + $0x128] sm:$0xff]
    %v92 = vld [vmem:[#allocation2 + $0x130] sm:$0xff]
    %v93 = vld [vmem:[#allocation2 + $0x138] sm:$0xff]
    %v94 = vld [vmem:[#allocation2 + $0x140] sm:$0xff]
    %v95 = vld [vmem:[#allocation2 + $0x148] sm:$0xff]
    %v96 = vld [vmem:[#allocation2 + $0x150] sm:$0xff]
    %v97 = vld [vmem:[#allocation2 + $0x158] sm:$0xff]
    %v98 = vld [vmem:[#allocation2 + $0x160] sm:$0xff]
    %v99 = vld [vmem:[#allocation2 + $0x168] sm:$0xff]
    %v100 = vld [vmem:[#allocation2 + $0x170] sm:$0xff]
    %v101 = vld [vmem:[#allocation2 + $0x178] sm:$0xff]
    %v102 = vld [vmem:[#allocation2 + $0x180] sm:$0xff]
    %v103 = vld [vmem:[#allocation2 + $0x188] sm:$0xff]
    %v104 = vld [vmem:[#allocation2 + $0x190] sm:$0xff]
    %v105 = vld [vmem:[#allocation2 + $0x198] sm:$0xff]
    %v106 = vld [vmem:[#allocation2 + $0x1a0] sm:$0xff]
    %v107 = vld [vmem:[#allocation2 + $0x1a8] sm:$0xff]
    %v108 = vld [vmem:[#allocation2 + $0x1b0] sm:$0xff]
    %v109 = vld [vmem:[#allocation2 + $0x1b8] sm:$0xff]
    %v110 = vld [vmem:[#allocation2 + $0x1c0] sm:$0xff]
    %v111 = vld [vmem:[#allocation2 + $0x1c8] sm:$0xff]
    %v112 = vld [vmem:[#allocation2 + $0x1d0] sm:$0xff]
    %v113 = vld [vmem:[#allocation2 + $0x1d8] sm:$0xff]
    %v114 = vld [vmem:[#allocation2 + $0x1e0] sm:$0xff]
    %v115 = vld [vmem:[#allocation2 + $0x1e8] sm:$0xff]
    %v116 = vld [vmem:[#allocation2 + $0x1f0] sm:$0xff]
    %v117 = vld [vmem:[#allocation2 + $0x1f8] sm:$0xff]
    %118 = vmatprep.subr.mxu0 %v115
    %119 = vmatpush1.msra.mxu0 %v114
    %120 = vmatprep.subr.mxu0 %v111
    %121 = vmatpush1.msra.mxu0 %v110
    %122 = vmatprep.subr.mxu0 %v107
    %123 = vmatpush1.msra.mxu0 %v106
    %124 = vmatprep.subr.mxu0 %v103
    %125 = vmatpush1.msra.mxu0 %v102
    %126 = vmatprep.subr.mxu0 %v99
    %127 = vmatpush1.msra.mxu0 %v98
    %128 = vmatprep.subr.mxu0 %v95
    %129 = vmatpush1.msra.mxu0 %v94
    %130 = vmatprep.subr.mxu0 %v91
    %131 = vmatpush1.msra.mxu0 %v90
    %132 = vmatprep.subr.mxu0 %v87
    %133 = vmatpush1.msra.mxu0 %v86
    %134 = vmatprep.subr.mxu0 %v83
    %135 = vmatpush1.msra.mxu0 %v82
    %136 = vmatprep.subr.mxu0 %v79
    %137 = vmatpush1.msra.mxu0 %v78
    %138 = vmatprep.subr.mxu0 %v75
    %139 = vmatpush1.msra.mxu0 %v74
    %140 = vmatprep.subr.mxu0 %v71
    %141 = vmatpush1.msra.mxu0 %v70
    %142 = vmatprep.subr.mxu0 %v67
    %143 = vmatpush1.msra.mxu0 %v66
    %144 = vmatprep.subr.mxu0 %v63
    %145 = vmatpush1.msra.mxu0 %v62
    %146 = vmatprep.subr.mxu0 %v59
    %147 = vmatpush1.msra.mxu0 %v58
    %148 = vmatprep.subr.mxu0 %v55
    %149 = vmatpush1.msra.mxu0 %v54
    %150 = vmatprep.subr.mxu0 0.0
    %151 = vmatpush2.msra.mxu0 0.0
    %152 = vmatprep.subr.mxu0 0.0
    %153 = vmatpush2.msra.mxu0 0.0
    %154 = vmatprep.subr.mxu0 0.0
    %155 = vmatpush2.msra.mxu0 0.0
    %156 = vmatprep.subr.mxu0 0.0
    %157 = vmatpush2.msra.mxu0 0.0
    %158 = vmatprep.subr.mxu0 0.0
    %159 = vmatpush2.msra.mxu0 0.0
    %160 = vmatprep.subr.mxu0 0.0
    %161 = vmatpush2.msra.mxu0 0.0
    %162 = vmatprep.subr.mxu0 0.0
    %163 = vmatpush2.msra.mxu0 0.0
    %164 = vmatprep.subr.mxu0 0.0
    %165 = vmatpush2.msra.mxu0 0.0
    %166 = vmatprep.subr.mxu0 0.0
    %167 = vmatpush2.msra.mxu0 0.0
    %168 = vmatprep.subr.mxu0 0.0
    %169 = vmatpush2.msra.mxu0 0.0
    %170 = vmatprep.subr.mxu0 0.0
    %171 = vmatpush2.msra.mxu0 0.0
    %172 = vmatprep.subr.mxu0 0.0
    %173 = vmatpush2.msra.mxu0 0.0
    %174 = vmatprep.subr.mxu0 0.0
    %175 = vmatpush2.msra.mxu0 0.0
    %176 = vmatprep.subr.mxu0 0.0
    %177 = vmatpush2.msra.mxu0 0.0
    %178 = vmatprep.subr.mxu0 0.0
    %179 = vmatpush2.msra.mxu0 0.0
    %180 = vmatprep.subr.mxu0 0.0
    %181 = vmatpush2.msra.mxu0 0.0
    %182 = vmatprep.mubr.f32.mxu0 0.0
    %183 = vmatmul.mubr.f32.gmra.mxu0 %v53
    %v184 = vpop.f32.mrf.mxu0
    %v185 = vadd.f32 0.0, %v184
    %v186 = vpop.f32.mrf.mxu0
    %v187 = vadd.f32 0.0, %v186
    %188 = vdwg.mxu0
    %189 = vmatprep.subr.mxu0 %v117
    %190 = vmatpush1.msra.mxu0 %v116
    %191 = vmatprep.subr.mxu0 %v113
    %192 = vmatpush1.msra.mxu0 %v112
    %193 = vmatprep.subr.mxu0 %v109
    %194 = vmatpush1.msra.mxu0 %v108
    %195 = vmatprep.subr.mxu0 %v105
    %196 = vmatpush1.msra.mxu0 %v104
    %197 = vmatprep.subr.mxu0 %v101
    %198 = vmatpush1.msra.mxu0 %v100
    %199 = vmatprep.subr.mxu0 %v97
    %200 = vmatpush1.msra.mxu0 %v96
    %201 = vmatprep.subr.mxu0 %v93
    %202 = vmatpush1.msra.mxu0 %v92
    %203 = vmatprep.subr.mxu0 %v89
    %204 = vmatpush1.msra.mxu0 %v88
    %205 = vmatprep.subr.mxu0 %v85
    %206 = vmatpush1.msra.mxu0 %v84
    %207 = vmatprep.subr.mxu0 %v81
    %208 = vmatpush1.msra.mxu0 %v80
    %209 = vmatprep.subr.mxu0 %v77
    %210 = vmatpush1.msra.mxu0 %v76
    %211 = vmatprep.subr.mxu0 %v73
    %212 = vmatpush1.msra.mxu0 %v72
    %213 = vmatprep.subr.mxu0 %v69
    %214 = vmatpush1.msra.mxu0 %v68
    %215 = vmatprep.subr.mxu0 %v65
    %216 = vmatpush1.msra.mxu0 %v64
    %217 = vmatprep.subr.mxu0 %v61
    %218 = vmatpush1.msra.mxu0 %v60
    %219 = vmatprep.subr.mxu0 %v57
    %220 = vmatpush1.msra.mxu0 %v56
    %221 = vmatprep.subr.mxu0 0.0
    %222 = vmatpush2.msra.mxu0 0.0
    %223 = vmatprep.subr.mxu0 0.0
    %224 = vmatpush2.msra.mxu0 0.0
    %225 = vmatprep.subr.mxu0 0.0
    %226 = vmatpush2.msra.mxu0 0.0
    %227 = vmatprep.subr.mxu0 0.0
    %228 = vmatpush2.msra.mxu0 0.0
    %229 = vmatprep.subr.mxu0 0.0
    %230 = vmatpush2.msra.mxu0 0.0
    %231 = vmatprep.subr.mxu0 0.0
    %232 = vmatpush2.msra.mxu0 0.0
    %233 = vmatprep.subr.mxu0 0.0
    %234 = vmatpush2.msra.mxu0 0.0
    %235 = vmatprep.subr.mxu0 0.0
    %236 = vmatpush2.msra.mxu0 0.0
    %237 = vmatprep.subr.mxu0 0.0
    %238 = vmatpush2.msra.mxu0 0.0
    %239 = vmatprep.subr.mxu0 0.0
    %240 = vmatpush2.msra.mxu0 0.0
    %241 = vmatprep.subr.mxu0 0.0
    %242 = vmatpush2.msra.mxu0 0.0
    %243 = vmatprep.subr.mxu0 0.0
    %244 = vmatpush2.msra.mxu0 0.0
    %245 = vmatprep.subr.mxu0 0.0
    %246 = vmatpush2.msra.mxu0 0.0
    %247 = vmatprep.subr.mxu0 0.0
    %248 = vmatpush2.msra.mxu0 0.0
    %249 = vmatprep.subr.mxu0 0.0
    %250 = vmatpush2.msra.mxu0 0.0
    %251 = vmatprep.subr.mxu0 0.0
    %252 = vmatpush2.msra.mxu0 0.0
    %253 = vmatprep.mubr.f32.mxu0 0.0
    %254 = vmatmul.mubr.f32.gmra.mxu0 %v53
    %v255 = vpop.f32.mrf.mxu0
    %v256 = vadd.f32 0.0, %v255
    %v257 = vpop.f32.mrf.mxu0
    %v258 = vadd.f32 0.0, %v257
    %259 = vdwg.mxu0
    %v260 = vld [vmem:[#allocation2 + $0x200] sm:$0xff]
    %v261 = vld [vmem:[#allocation2 + $0x208] sm:$0xff]
    %v262 = vld [vmem:[#allocation2 + $0x210] sm:$0xff]
    %v263 = vld [vmem:[#allocation2 + $0x218] sm:$0xff]
    %v264 = vld [vmem:[#allocation2 + $0x220] sm:$0xff]
    %v265 = vld [vmem:[#allocation2 + $0x228] sm:$0xff]
    %v266 = vld [vmem:[#allocation2 + $0x230] sm:$0xff]
    %v267 = vld [vmem:[#allocation2 + $0x238] sm:$0xff]
    %v268 = vld [vmem:[#allocation2 + $0x240] sm:$0xff]
    %v269 = vld [vmem:[#allocation2 + $0x248] sm:$0xff]
    %v270 = vld [vmem:[#allocation2 + $0x250] sm:$0xff]
    %v271 = vld [vmem:[#allocation2 + $0x258] sm:$0xff]
    %v272 = vld [vmem:[#allocation2 + $0x260] sm:$0xff]
    %v273 = vld [vmem:[#allocation2 + $0x268] sm:$0xff]
    %v274 = vld [vmem:[#allocation2 + $0x270] sm:$0xff]
    %v275 = vld [vmem:[#allocation2 + $0x278] sm:$0xff]
    %v276 = vld [vmem:[#allocation2 + $0x280] sm:$0xff]
    %v277 = vld [vmem:[#allocation2 + $0x288] sm:$0xff]
    %v278 = vld [vmem:[#allocation2 + $0x290] sm:$0xff]
    %v279 = vld [vmem:[#allocation2 + $0x298] sm:$0xff]
    %v280 = vld [vmem:[#allocation2 + $0x2a0] sm:$0xff]
    %v281 = vld [vmem:[#allocation2 + $0x2a8] sm:$0xff]
    %v282 = vld [vmem:[#allocation2 + $0x2b0] sm:$0xff]
    %v283 = vld [vmem:[#allocation2 + $0x2b8] sm:$0xff]
    %v284 = vld [vmem:[#allocation2 + $0x2c0] sm:$0xff]
    %v285 = vld [vmem:[#allocation2 + $0x2c8] sm:$0xff]
    %v286 = vld [vmem:[#allocation2 + $0x2d0] sm:$0xff]
    %v287 = vld [vmem:[#allocation2 + $0x2d8] sm:$0xff]
    %v288 = vld [vmem:[#allocation2 + $0x2e0] sm:$0xff]
    %v289 = vld [vmem:[#allocation2 + $0x2e8] sm:$0xff]
    %v290 = vld [vmem:[#allocation2 + $0x2f0] sm:$0xff]
    %v291 = vld [vmem:[#allocation2 + $0x2f8] sm:$0xff]
    %v292 = vld [vmem:[#allocation2 + $0x300] sm:$0xff]
    %v293 = vld [vmem:[#allocation2 + $0x308] sm:$0xff]
    %v294 = vld [vmem:[#allocation2 + $0x310] sm:$0xff]
    %v295 = vld [vmem:[#allocation2 + $0x318] sm:$0xff]
    %v296 = vld [vmem:[#allocation2 + $0x320] sm:$0xff]
    %v297 = vld [vmem:[#allocation2 + $0x328] sm:$0xff]
    %v298 = vld [vmem:[#allocation2 + $0x330] sm:$0xff]
    %v299 = vld [vmem:[#allocation2 + $0x338] sm:$0xff]
    %v300 = vld [vmem:[#allocation2 + $0x340] sm:$0xff]
    %v301 = vld [vmem:[#allocation2 + $0x348] sm:$0xff]
    %v302 = vld [vmem:[#allocation2 + $0x350] sm:$0xff]
    %v303 = vld [vmem:[#allocation2 + $0x358] sm:$0xff]
    %v304 = vld [vmem:[#allocation2 + $0x360] sm:$0xff]
    %v305 = vld [vmem:[#allocation2 + $0x368] sm:$0xff]
    %v306 = vld [vmem:[#allocation2 + $0x370] sm:$0xff]
    %v307 = vld [vmem:[#allocation2 + $0x378] sm:$0xff]
    %v308 = vld [vmem:[#allocation2 + $0x380] sm:$0xff]
    %v309 = vld [vmem:[#allocation2 + $0x388] sm:$0xff]
    %v310 = vld [vmem:[#allocation2 + $0x390] sm:$0xff]
    %v311 = vld [vmem:[#allocation2 + $0x398] sm:$0xff]
    %v312 = vld [vmem:[#allocation2 + $0x3a0] sm:$0xff]
    %v313 = vld [vmem:[#allocation2 + $0x3a8] sm:$0xff]
    %v314 = vld [vmem:[#allocation2 + $0x3b0] sm:$0xff]
    %v315 = vld [vmem:[#allocation2 + $0x3b8] sm:$0xff]
    %v316 = vld [vmem:[#allocation2 + $0x3c0] sm:$0xff]
    %v317 = vld [vmem:[#allocation2 + $0x3c8] sm:$0xff]
    %v318 = vld [vmem:[#allocation2 + $0x3d0] sm:$0xff]
    %v319 = vld [vmem:[#allocation2 + $0x3d8] sm:$0xff]
    %v320 = vld [vmem:[#allocation2 + $0x3e0] sm:$0xff]
    %v321 = vld [vmem:[#allocation2 + $0x3e8] sm:$0xff]
    %v322 = vld [vmem:[#allocation2 + $0x3f0] sm:$0xff]
    %v323 = vld [vmem:[#allocation2 + $0x3f8] sm:$0xff]
    %v324 = vld [vmem:[%s3] sm:$0xff]
    %325 = vmatprep.subr.mxu0 %v321
    %326 = vmatpush1.msra.mxu0 %v320
    %327 = vmatprep.subr.mxu0 %v317
    %328 = vmatpush1.msra.mxu0 %v316
    %329 = vmatprep.subr.mxu0 %v313
    %330 = vmatpush1.msra.mxu0 %v312
    %331 = vmatprep.subr.mxu0 %v309
    %332 = vmatpush1.msra.mxu0 %v308
    %333 = vmatprep.subr.mxu0 %v305
    %334 = vmatpush1.msra.mxu0 %v304
    %335 = vmatprep.subr.mxu0 %v301
    %336 = vmatpush1.msra.mxu0 %v300
    %337 = vmatprep.subr.mxu0 %v297
    %338 = vmatpush1.msra.mxu0 %v296
    %339 = vmatprep.subr.mxu0 %v293
    %340 = vmatpush1.msra.mxu0 %v292
    %341 = vmatprep.subr.mxu0 %v289
    %342 = vmatpush1.msra.mxu0 %v288
    %343 = vmatprep.subr.mxu0 %v285
    %344 = vmatpush1.msra.mxu0 %v284
    %345 = vmatprep.subr.mxu0 %v281
    %346 = vmatpush1.msra.mxu0 %v280
    %347 = vmatprep.subr.mxu0 %v277
    %348 = vmatpush1.msra.mxu0 %v276
    %349 = vmatprep.subr.mxu0 %v273
    %350 = vmatpush1.msra.mxu0 %v272
    %351 = vmatprep.subr.mxu0 %v269
    %352 = vmatpush1.msra.mxu0 %v268
    %353 = vmatprep.subr.mxu0 %v265
    %354 = vmatpush1.msra.mxu0 %v264
    %355 = vmatprep.subr.mxu0 %v261
    %356 = vmatpush1.msra.mxu0 %v260
    %357 = vmatprep.subr.mxu0 0.0
    %358 = vmatpush2.msra.mxu0 0.0
    %359 = vmatprep.subr.mxu0 0.0
    %360 = vmatpush2.msra.mxu0 0.0
    %361 = vmatprep.subr.mxu0 0.0
    %362 = vmatpush2.msra.mxu0 0.0
    %363 = vmatprep.subr.mxu0 0.0
    %364 = vmatpush2.msra.mxu0 0.0
    %365 = vmatprep.subr.mxu0 0.0
    %366 = vmatpush2.msra.mxu0 0.0
    %367 = vmatprep.subr.mxu0 0.0
    %368 = vmatpush2.msra.mxu0 0.0
    %369 = vmatprep.subr.mxu0 0.0
    %370 = vmatpush2.msra.mxu0 0.0
    %371 = vmatprep.subr.mxu0 0.0
    %372 = vmatpush2.msra.mxu0 0.0
    %373 = vmatprep.subr.mxu0 0.0
    %374 = vmatpush2.msra.mxu0 0.0
    %375 = vmatprep.subr.mxu0 0.0
    %376 = vmatpush2.msra.mxu0 0.0
    %377 = vmatprep.subr.mxu0 0.0
    %378 = vmatpush2.msra.mxu0 0.0
    %379 = vmatprep.subr.mxu0 0.0
    %380 = vmatpush2.msra.mxu0 0.0
    %381 = vmatprep.subr.mxu0 0.0
    %382 = vmatpush2.msra.mxu0 0.0
    %383 = vmatprep.subr.mxu0 0.0
    %384 = vmatpush2.msra.mxu0 0.0
    %385 = vmatprep.subr.mxu0 0.0
    %386 = vmatpush2.msra.mxu0 0.0
    %387 = vmatprep.subr.mxu0 0.0
    %388 = vmatpush2.msra.mxu0 0.0
    %389 = vmatprep.mubr.f32.mxu0 0.0
    %390 = vmatmul.mubr.f32.gmra.mxu0 %v324
    %v391 = vpop.f32.mrf.mxu0
    %v392 = vadd.f32 0.0, %v391
    %v393 = vpop.f32.mrf.mxu0
    %v394 = vadd.f32 0.0, %v393
    %395 = vdwg.mxu0
    %396 = vmatprep.subr.mxu0 %v323
    %397 = vmatpush1.msra.mxu0 %v322
    %398 = vmatprep.subr.mxu0 %v319
    %399 = vmatpush1.msra.mxu0 %v318
    %400 = vmatprep.subr.mxu0 %v315
    %401 = vmatpush1.msra.mxu0 %v314
    %402 = vmatprep.subr.mxu0 %v311
    %403 = vmatpush1.msra.mxu0 %v310
    %404 = vmatprep.subr.mxu0 %v307
    %405 = vmatpush1.msra.mxu0 %v306
    %406 = vmatprep.subr.mxu0 %v303
    %407 = vmatpush1.msra.mxu0 %v302
    %408 = vmatprep.subr.mxu0 %v299
    %409 = vmatpush1.msra.mxu0 %v298
    %410 = vmatprep.subr.mxu0 %v295
    %411 = vmatpush1.msra.mxu0 %v294
    %412 = vmatprep.subr.mxu0 %v291
    %413 = vmatpush1.msra.mxu0 %v290
    %414 = vmatprep.subr.mxu0 %v287
    %415 = vmatpush1.msra.mxu0 %v286
    %416 = vmatprep.subr.mxu0 %v283
    %417 = vmatpush1.msra.mxu0 %v282
    %418 = vmatprep.subr.mxu0 %v279
    %419 = vmatpush1.msra.mxu0 %v278
    %420 = vmatprep.subr.mxu0 %v275
    %421 = vmatpush1.msra.mxu0 %v274
    %422 = vmatprep.subr.mxu0 %v271
    %423 = vmatpush1.msra.mxu0 %v270
    %424 = vmatprep.subr.mxu0 %v267
    %425 = vmatpush1.msra.mxu0 %v266
    %426 = vmatprep.subr.mxu0 %v263
    %427 = vmatpush1.msra.mxu0 %v262
    %428 = vmatprep.subr.mxu0 0.0
    %429 = vmatpush2.msra.mxu0 0.0
    %430 = vmatprep.subr.mxu0 0.0
    %431 = vmatpush2.msra.mxu0 0.0
    %432 = vmatprep.subr.mxu0 0.0
    %433 = vmatpush2.msra.mxu0 0.0
    %434 = vmatprep.subr.mxu0 0.0
    %435 = vmatpush2.msra.mxu0 0.0
    %436 = vmatprep.subr.mxu0 0.0
    %437 = vmatpush2.msra.mxu0 0.0
    %438 = vmatprep.subr.mxu0 0.0
    %439 = vmatpush2.msra.mxu0 0.0
    %440 = vmatprep.subr.mxu0 0.0
    %441 = vmatpush2.msra.mxu0 0.0
    %442 = vmatprep.subr.mxu0 0.0
    %443 = vmatpush2.msra.mxu0 0.0
    %444 = vmatprep.subr.mxu0 0.0
    %445 = vmatpush2.msra.mxu0 0.0
    %446 = vmatprep.subr.mxu0 0.0
    %447 = vmatpush2.msra.mxu0 0.0
    %448 = vmatprep.subr.mxu0 0.0
    %449 = vmatpush2.msra.mxu0 0.0
    %450 = vmatprep.subr.mxu0 0.0
    %451 = vmatpush2.msra.mxu0 0.0
    %452 = vmatprep.subr.mxu0 0.0
    %453 = vmatpush2.msra.mxu0 0.0
    %454 = vmatprep.subr.mxu0 0.0
    %455 = vmatpush2.msra.mxu0 0.0
    %456 = vmatprep.subr.mxu0 0.0
    %457 = vmatpush2.msra.mxu0 0.0
    %458 = vmatprep.subr.mxu0 0.0
    %459 = vmatpush2.msra.mxu0 0.0
    %460 = vmatprep.mubr.f32.mxu0 0.0
    %461 = vmatmul.mubr.f32.gmra.mxu0 %v324
    %v462 = vpop.f32.mrf.mxu0
    %v463 = vadd.f32 0.0, %v462
    %v464 = vpop.f32.mrf.mxu0
    %v465 = vadd.f32 0.0, %v464
    %466 = vdwg.mxu0
    %v467 = vadd.f32 %v185, %v392
    %v468 = vadd.f32 %v187, %v394
    %v469 = vadd.f32 %v256, %v463
    %v470 = vadd.f32 %v258, %v465
    %v471 = vxor.u32 %v467, 2147483648
    %v472 = vxor.u32 %v468, 2147483648
    %v473 = vxor.u32 %v469, 2147483648
    %v474 = vmul.f32 %v471, 1.442695
    %v475 = vpow.pop %v474
    %v476 = vmul.f32 %v472, 1.442695
    %v477 = vpow.pop %v476
    %v478 = vmul.f32 %v473, 1.442695
    %v479 = vpow.pop %v478
    %v480 = vadd.f32 %v475, 1.0
    %v481 = vadd.f32 %v477, 1.0
    %v482 = vadd.f32 %v479, 1.0
    %v483 = vrcp.pop %v480
    %v484 = vmul.f32 1.0, %v483
    %v485 = vrcp.pop %v481
    %v486 = vmul.f32 1.0, %v485
    %v487 = vrcp.pop %v482
    %v488 = vmul.f32 1.0, %v487
    %v489 = vtanh.pop %v470
    %v491 = vrot.slane %v324, 1
    %v493 = vmul.f32 %v486, %v491
    %v494 = vmul.f32 %v484, %v489
    %v495 = vadd.f32 %v493, %v494
    %v496 = vtanh.pop %v495
    %v497 = vmul.f32 %v488, %v496
    %498 = vmatprep.subr.mxu0 %v321
    %499 = vmatpush1.msra.mxu0 %v320
    %500 = vmatprep.subr.mxu0 %v317
    %501 = vmatpush1.msra.mxu0 %v316
    %502 = vmatprep.subr.mxu0 %v313
    %503 = vmatpush1.msra.mxu0 %v312
    %504 = vmatprep.subr.mxu0 %v309
    %505 = vmatpush1.msra.mxu0 %v308
    %506 = vmatprep.subr.mxu0 %v305
    %507 = vmatpush1.msra.mxu0 %v304
    %508 = vmatprep.subr.mxu0 %v301
    %509 = vmatpush1.msra.mxu0 %v300
    %510 = vmatprep.subr.mxu0 %v297
    %511 = vmatpush1.msra.mxu0 %v296
    %512 = vmatprep.subr.mxu0 %v293
    %513 = vmatpush1.msra.mxu0 %v292
    %514 = vmatprep.subr.mxu0 %v289
    %515 = vmatpush1.msra.mxu0 %v288
    %516 = vmatprep.subr.mxu0 %v285
    %517 = vmatpush1.msra.mxu0 %v284
    %518 = vmatprep.subr.mxu0 %v281
    %519 = vmatpush1.msra.mxu0 %v280
    %520 = vmatprep.subr.mxu0 %v277
    %521 = vmatpush1.msra.mxu0 %v276
    %522 = vmatprep.subr.mxu0 %v273
    %523 = vmatpush1.msra.mxu0 %v272
    %524 = vmatprep.subr.mxu0 %v269
    %525 = vmatpush1.msra.mxu0 %v268
    %526 = vmatprep.subr.mxu0 %v265
    %527 = vmatpush1.msra.mxu0 %v264
    %528 = vmatprep.subr.mxu0 %v261
    %529 = vmatpush1.msra.mxu0 %v260
    %530 = vmatprep.subr.mxu0 0.0
    %531 = vmatpush2.msra.mxu0 0.0
    %532 = vmatprep.subr.mxu0 0.0
    %533 = vmatpush2.msra.mxu0 0.0
    %534 = vmatprep.subr.mxu0 0.0
    %535 = vmatpush2.msra.mxu0 0.0
    %536 = vmatprep.subr.mxu0 0.0
    %537 = vmatpush2.msra.mxu0 0.0
    %538 = vmatprep.subr.mxu0 0.0
    %539 = vmatpush2.msra.mxu0 0.0
    %540 = vmatprep.subr.mxu0 0.0
    %541 = vmatpush2.msra.mxu0 0.0
    %542 = vmatprep.subr.mxu0 0.0
    %543 = vmatpush2.msra.mxu0 0.0
    %544 = vmatprep.subr.mxu0 0.0
    %545 = vmatpush2.msra.mxu0 0.0
    %546 = vmatprep.subr.mxu0 0.0
    %547 = vmatpush2.msra.mxu0 0.0
    %548 = vmatprep.subr.mxu0 0.0
    %549 = vmatpush2.msra.mxu0 0.0
    %550 = vmatprep.subr.mxu0 0.0
    %551 = vmatpush2.msra.mxu0 0.0
    %552 = vmatprep.subr.mxu0 0.0
    %553 = vmatpush2.msra.mxu0 0.0
    %554 = vmatprep.subr.mxu0 0.0
    %555 = vmatpush2.msra.mxu0 0.0
    %556 = vmatprep.subr.mxu0 0.0
    %557 = vmatpush2.msra.mxu0 0.0
    %558 = vmatprep.subr.mxu0 0.0
    %559 = vmatpush2.msra.mxu0 0.0
    %560 = vmatprep.subr.mxu0 0.0
    %561 = vmatpush2.msra.mxu0 0.0
    %562 = vmatprep.mubr.f32.mxu0 0.0
    %563 = vmatmul.mubr.f32.gmra.mxu0 %v497
    %v564 = vpop.f32.mrf.mxu0
    %v565 = vadd.f32 0.0, %v564
    %v566 = vpop.f32.mrf.mxu0
    %v567 = vadd.f32 0.0, %v566
    %568 = vdwg.mxu0
    %569 = vmatprep.subr.mxu0 %v323
    %570 = vmatpush1.msra.mxu0 %v322
    %571 = vmatprep.subr.mxu0 %v319
    %572 = vmatpush1.msra.mxu0 %v318
    %573 = vmatprep.subr.mxu0 %v315
    %574 = vmatpush1.msra.mxu0 %v314
    %575 = vmatprep.subr.mxu0 %v311
    %576 = vmatpush1.msra.mxu0 %v310
    %577 = vmatprep.subr.mxu0 %v307
    %578 = vmatpush1.msra.mxu0 %v306
    %579 = vmatprep.subr.mxu0 %v303
    %580 = vmatpush1.msra.mxu0 %v302
    %581 = vmatprep.subr.mxu0 %v299
    %582 = vmatpush1.msra.mxu0 %v298
    %583 = vmatprep.subr.mxu0 %v295
    %584 = vmatpush1.msra.mxu0 %v294
    %585 = vmatprep.subr.mxu0 %v291
    %586 = vmatpush1.msra.mxu0 %v290
    %587 = vmatprep.subr.mxu0 %v287
    %588 = vmatpush1.msra.mxu0 %v286
    %589 = vmatprep.subr.mxu0 %v283
    %590 = vmatpush1.msra.mxu0 %v282
    %591 = vmatprep.subr.mxu0 %v279
    %592 = vmatpush1.msra.mxu0 %v278
    %593 = vmatprep.subr.mxu0 %v275
    %594 = vmatpush1.msra.mxu0 %v274
    %595 = vmatprep.subr.mxu0 %v271
    %596 = vmatpush1.msra.mxu0 %v270
    %597 = vmatprep.subr.mxu0 %v267
    %598 = vmatpush1.msra.mxu0 %v266
    %599 = vmatprep.subr.mxu0 %v263
    %600 = vmatpush1.msra.mxu0 %v262
    %601 = vmatprep.subr.mxu0 0.0
    %602 = vmatpush2.msra.mxu0 0.0
    %603 = vmatprep.subr.mxu0 0.0
    %604 = vmatpush2.msra.mxu0 0.0
    %605 = vmatprep.subr.mxu0 0.0
    %606 = vmatpush2.msra.mxu0 0.0
    %607 = vmatprep.subr.mxu0 0.0
    %608 = vmatpush2.msra.mxu0 0.0
    %609 = vmatprep.subr.mxu0 0.0
    %610 = vmatpush2.msra.mxu0 0.0
    %611 = vmatprep.subr.mxu0 0.0
    %612 = vmatpush2.msra.mxu0 0.0
    %613 = vmatprep.subr.mxu0 0.0
    %614 = vmatpush2.msra.mxu0 0.0
    %615 = vmatprep.subr.mxu0 0.0
    %616 = vmatpush2.msra.mxu0 0.0
    %617 = vmatprep.subr.mxu0 0.0
    %618 = vmatpush2.msra.mxu0 0.0
    %619 = vmatprep.subr.mxu0 0.0
    %620 = vmatpush2.msra.mxu0 0.0
    %621 = vmatprep.subr.mxu0 0.0
    %622 = vmatpush2.msra.mxu0 0.0
    %623 = vmatprep.subr.mxu0 0.0
    %624 = vmatpush2.msra.mxu0 0.0
    %625 = vmatprep.subr.mxu0 0.0
    %626 = vmatpush2.msra.mxu0 0.0
    %627 = vmatprep.subr.mxu0 0.0
    %628 = vmatpush2.msra.mxu0 0.0
    %629 = vmatprep.subr.mxu0 0.0
    %630 = vmatpush2.msra.mxu0 0.0
    %631 = vmatprep.subr.mxu0 0.0
    %632 = vmatpush2.msra.mxu0 0.0
    %633 = vmatprep.mubr.f32.mxu0 0.0
    %634 = vmatmul.mubr.f32.gmra.mxu0 %v497
    %v635 = vpop.f32.mrf.mxu0
    %v636 = vadd.f32 0.0, %v635
    %v637 = vpop.f32.mrf.mxu0
    %v638 = vadd.f32 0.0, %v637
    %639 = vdwg.mxu0
    %v644 = vrot.slane %v565, 7
    %v645 = vrot.slane %v567, 7
    %v646 = vrot.slane %v636, 7
    %v647 = vrot.slane %v638, 7
    %v652 = vadd.f32 %v185, %v644
    %v653 = vadd.f32 %v187, %v645
    %v654 = vadd.f32 %v256, %v646
    %v655 = vadd.f32 %v258, %v647
    %v656 = vxor.u32 %v652, 2147483648
    %v657 = vxor.u32 %v653, 2147483648
    %v658 = vxor.u32 %v654, 2147483648
    %v659 = vmul.f32 %v656, 1.442695
    %v660 = vpow.pop %v659
    %v661 = vmul.f32 %v657, 1.442695
    %v662 = vpow.pop %v661
    %v663 = vmul.f32 %v658, 1.442695
    %v664 = vpow.pop %v663
    %v665 = vadd.f32 %v660, 1.0
    %v666 = vadd.f32 %v662, 1.0
    %v667 = vadd.f32 %v664, 1.0
    %v668 = vrcp.pop %v665
    %v669 = vmul.f32 1.0, %v668
    %v670 = vrcp.pop %v666
    %v671 = vmul.f32 1.0, %v670
    %v672 = vrcp.pop %v667
    %v673 = vmul.f32 1.0, %v672
    %v674 = vtanh.pop %v655
    %v676 = vrot.slane %v495, 7
    %v678 = vmul.f32 %v671, %v676
    %v679 = vmul.f32 %v669, %v674
    %v680 = vadd.f32 %v678, %v679
    %v681 = vtanh.pop %v680
    %v682 = vmul.f32 %v673, %v681
    %v684 = vrot.slane %v682, 1
    %686 = vmatprep.subr.mxu0 %v321
    %687 = vmatpush1.msra.mxu0 %v320
    %688 = vmatprep.subr.mxu0 %v317
    %689 = vmatpush1.msra.mxu0 %v316
    %690 = vmatprep.subr.mxu0 %v313
    %691 = vmatpush1.msra.mxu0 %v312
    %692 = vmatprep.subr.mxu0 %v309
    %693 = vmatpush1.msra.mxu0 %v308
    %694 = vmatprep.subr.mxu0 %v305
    %695 = vmatpush1.msra.mxu0 %v304
    %696 = vmatprep.subr.mxu0 %v301
    %697 = vmatpush1.msra.mxu0 %v300
    %698 = vmatprep.subr.mxu0 %v297
    %699 = vmatpush1.msra.mxu0 %v296
    %700 = vmatprep.subr.mxu0 %v293
    %701 = vmatpush1.msra.mxu0 %v292
    %702 = vmatprep.subr.mxu0 %v289
    %703 = vmatpush1.msra.mxu0 %v288
    %704 = vmatprep.subr.mxu0 %v285
    %705 = vmatpush1.msra.mxu0 %v284
    %706 = vmatprep.subr.mxu0 %v281
    %707 = vmatpush1.msra.mxu0 %v280
    %708 = vmatprep.subr.mxu0 %v277
    %709 = vmatpush1.msra.mxu0 %v276
    %710 = vmatprep.subr.mxu0 %v273
    %711 = vmatpush1.msra.mxu0 %v272
    %712 = vmatprep.subr.mxu0 %v269
    %713 = vmatpush1.msra.mxu0 %v268
    %714 = vmatprep.subr.mxu0 %v265
    %715 = vmatpush1.msra.mxu0 %v264
    %716 = vmatprep.subr.mxu0 %v261
    %717 = vmatpush1.msra.mxu0 %v260
    %718 = vmatprep.subr.mxu0 0.0
    %719 = vmatpush2.msra.mxu0 0.0
    %720 = vmatprep.subr.mxu0 0.0
    %721 = vmatpush2.msra.mxu0 0.0
    %722 = vmatprep.subr.mxu0 0.0
    %723 = vmatpush2.msra.mxu0 0.0
    %724 = vmatprep.subr.mxu0 0.0
    %725 = vmatpush2.msra.mxu0 0.0
    %726 = vmatprep.subr.mxu0 0.0
    %727 = vmatpush2.msra.mxu0 0.0
    %728 = vmatprep.subr.mxu0 0.0
    %729 = vmatpush2.msra.mxu0 0.0
    %730 = vmatprep.subr.mxu0 0.0
    %731 = vmatpush2.msra.mxu0 0.0
    %732 = vmatprep.subr.mxu0 0.0
    %733 = vmatpush2.msra.mxu0 0.0
    %734 = vmatprep.subr.mxu0 0.0
    %735 = vmatpush2.msra.mxu0 0.0
    %736 = vmatprep.subr.mxu0 0.0
    %737 = vmatpush2.msra.mxu0 0.0
    %738 = vmatprep.subr.mxu0 0.0
    %739 = vmatpush2.msra.mxu0 0.0
    %740 = vmatprep.subr.mxu0 0.0
    %741 = vmatpush2.msra.mxu0 0.0
    %742 = vmatprep.subr.mxu0 0.0
    %743 = vmatpush2.msra.mxu0 0.0
    %744 = vmatprep.subr.mxu0 0.0
    %745 = vmatpush2.msra.mxu0 0.0
    %746 = vmatprep.subr.mxu0 0.0
    %747 = vmatpush2.msra.mxu0 0.0
    %748 = vmatprep.subr.mxu0 0.0
    %749 = vmatpush2.msra.mxu0 0.0
    %750 = vmatprep.mubr.f32.mxu0 0.0
    %751 = vmatmul.mubr.f32.gmra.mxu0 %v684
    %v752 = vpop.f32.mrf.mxu0
    %v753 = vadd.f32 0.0, %v752
    %v754 = vpop.f32.mrf.mxu0
    %v755 = vadd.f32 0.0, %v754
    %756 = vdwg.mxu0
    %757 = vmatprep.subr.mxu0 %v323
    %758 = vmatpush1.msra.mxu0 %v322
    %759 = vmatprep.subr.mxu0 %v319
    %760 = vmatpush1.msra.mxu0 %v318
    %761 = vmatprep.subr.mxu0 %v315
    %762 = vmatpush1.msra.mxu0 %v314
    %763 = vmatprep.subr.mxu0 %v311
    %764 = vmatpush1.msra.mxu0 %v310
    %765 = vmatprep.subr.mxu0 %v307
    %766 = vmatpush1.msra.mxu0 %v306
    %767 = vmatprep.subr.mxu0 %v303
    %768 = vmatpush1.msra.mxu0 %v302
    %769 = vmatprep.subr.mxu0 %v299
    %770 = vmatpush1.msra.mxu0 %v298
    %771 = vmatprep.subr.mxu0 %v295
    %772 = vmatpush1.msra.mxu0 %v294
    %773 = vmatprep.subr.mxu0 %v291
    %774 = vmatpush1.msra.mxu0 %v290
    %775 = vmatprep.subr.mxu0 %v287
    %776 = vmatpush1.msra.mxu0 %v286
    %777 = vmatprep.subr.mxu0 %v283
    %778 = vmatpush1.msra.mxu0 %v282
    %779 = vmatprep.subr.mxu0 %v279
    %780 = vmatpush1.msra.mxu0 %v278
    %781 = vmatprep.subr.mxu0 %v275
    %782 = vmatpush1.msra.mxu0 %v274
    %783 = vmatprep.subr.mxu0 %v271
    %784 = vmatpush1.msra.mxu0 %v270
    %785 = vmatprep.subr.mxu0 %v267
    %786 = vmatpush1.msra.mxu0 %v266
    %787 = vmatprep.subr.mxu0 %v263
    %788 = vmatpush1.msra.mxu0 %v262
    %789 = vmatprep.subr.mxu0 0.0
    %790 = vmatpush2.msra.mxu0 0.0
    %791 = vmatprep.subr.mxu0 0.0
    %792 = vmatpush2.msra.mxu0 0.0
    %793 = vmatprep.subr.mxu0 0.0
    %794 = vmatpush2.msra.mxu0 0.0
    %795 = vmatprep.subr.mxu0 0.0
    %796 = vmatpush2.msra.mxu0 0.0
    %797 = vmatprep.subr.mxu0 0.0
    %798 = vmatpush2.msra.mxu0 0.0
    %799 = vmatprep.subr.mxu0 0.0
    %800 = vmatpush2.msra.mxu0 0.0
    %801 = vmatprep.subr.mxu0 0.0
    %802 = vmatpush2.msra.mxu0 0.0
    %803 = vmatprep.subr.mxu0 0.0
    %804 = vmatpush2.msra.mxu0 0.0
    %805 = vmatprep.subr.mxu0 0.0
    %806 = vmatpush2.msra.mxu0 0.0
    %807 = vmatprep.subr.mxu0 0.0
    %808 = vmatpush2.msra.mxu0 0.0
    %809 = vmatprep.subr.mxu0 0.0
    %810 = vmatpush2.msra.mxu0 0.0
    %811 = vmatprep.subr.mxu0 0.0
    %812 = vmatpush2.msra.mxu0 0.0
    %813 = vmatprep.subr.mxu0 0.0
    %814 = vmatpush2.msra.mxu0 0.0
    %815 = vmatprep.subr.mxu0 0.0
    %816 = vmatpush2.msra.mxu0 0.0
    %817 = vmatprep.subr.mxu0 0.0
    %818 = vmatpush2.msra.mxu0 0.0
    %819 = vmatprep.subr.mxu0 0.0
    %820 = vmatpush2.msra.mxu0 0.0
    %821 = vmatprep.mubr.f32.mxu0 0.0
    %822 = vmatmul.mubr.f32.gmra.mxu0 %v684
    %v823 = vpop.f32.mrf.mxu0
    %v824 = vadd.f32 0.0, %v823
    %v825 = vpop.f32.mrf.mxu0
    %v826 = vadd.f32 0.0, %v825
    %827 = vdwg.mxu0
    %v832 = vrot.slane %v753, 6
    %v833 = vrot.slane %v755, 6
    %v834 = vrot.slane %v824, 6
    %v835 = vrot.slane %v826, 6
    %v840 = vadd.f32 %v185, %v832
    %v841 = vadd.f32 %v187, %v833
    %v842 = vadd.f32 %v256, %v834
    %v843 = vadd.f32 %v258, %v835
    %v844 = vxor.u32 %v840, 2147483648
    %v845 = vxor.u32 %v841, 2147483648
    %v846 = vxor.u32 %v842, 2147483648
    %v847 = vmul.f32 %v844, 1.442695
    %v848 = vpow.pop %v847
    %v849 = vmul.f32 %v845, 1.442695
    %v850 = vpow.pop %v849
    %v851 = vmul.f32 %v846, 1.442695
    %v852 = vpow.pop %v851
    %v853 = vadd.f32 %v848, 1.0
    %v854 = vadd.f32 %v850, 1.0
    %v855 = vadd.f32 %v852, 1.0
    %v856 = vrcp.pop %v853
    %v857 = vmul.f32 1.0, %v856
    %v858 = vrcp.pop %v854
    %v859 = vmul.f32 1.0, %v858
    %v860 = vrcp.pop %v855
    %v861 = vmul.f32 1.0, %v860
    %v862 = vtanh.pop %v843
    %v864 = vrot.slane %v680, 7
    %v866 = vmul.f32 %v859, %v864
    %v867 = vmul.f32 %v857, %v862
    %v868 = vadd.f32 %v866, %v867
    %v869 = vtanh.pop %v868
    %v870 = vmul.f32 %v861, %v869
    %v872 = vrot.slane %v870, 2
    %874 = vmatprep.subr.mxu0 %v321
    %875 = vmatpush1.msra.mxu0 %v320
    %876 = vmatprep.subr.mxu0 %v317
    %877 = vmatpush1.msra.mxu0 %v316
    %878 = vmatprep.subr.mxu0 %v313
    %879 = vmatpush1.msra.mxu0 %v312
    %880 = vmatprep.subr.mxu0 %v309
    %881 = vmatpush1.msra.mxu0 %v308
    %882 = vmatprep.subr.mxu0 %v305
    %883 = vmatpush1.msra.mxu0 %v304
    %884 = vmatprep.subr.mxu0 %v301
    %885 = vmatpush1.msra.mxu0 %v300
    %886 = vmatprep.subr.mxu0 %v297
    %887 = vmatpush1.msra.mxu0 %v296
    %888 = vmatprep.subr.mxu0 %v293
    %889 = vmatpush1.msra.mxu0 %v292
    %890 = vmatprep.subr.mxu0 %v289
    %891 = vmatpush1.msra.mxu0 %v288
    %892 = vmatprep.subr.mxu0 %v285
    %893 = vmatpush1.msra.mxu0 %v284
    %894 = vmatprep.subr.mxu0 %v281
    %895 = vmatpush1.msra.mxu0 %v280
    %896 = vmatprep.subr.mxu0 %v277
    %897 = vmatpush1.msra.mxu0 %v276
    %898 = vmatprep.subr.mxu0 %v273
    %899 = vmatpush1.msra.mxu0 %v272
    %900 = vmatprep.subr.mxu0 %v269
    %901 = vmatpush1.msra.mxu0 %v268
    %902 = vmatprep.subr.mxu0 %v265
    %903 = vmatpush1.msra.mxu0 %v264
    %904 = vmatprep.subr.mxu0 %v261
    %905 = vmatpush1.msra.mxu0 %v260
    %906 = vmatprep.subr.mxu0 0.0
    %907 = vmatpush2.msra.mxu0 0.0
    %908 = vmatprep.subr.mxu0 0.0
    %909 = vmatpush2.msra.mxu0 0.0
    %910 = vmatprep.subr.mxu0 0.0
    %911 = vmatpush2.msra.mxu0 0.0
    %912 = vmatprep.subr.mxu0 0.0
    %913 = vmatpush2.msra.mxu0 0.0
    %914 = vmatprep.subr.mxu0 0.0
    %915 = vmatpush2.msra.mxu0 0.0
    %916 = vmatprep.subr.mxu0 0.0
    %917 = vmatpush2.msra.mxu0 0.0
    %918 = vmatprep.subr.mxu0 0.0
    %919 = vmatpush2.msra.mxu0 0.0
    %920 = vmatprep.subr.mxu0 0.0
    %921 = vmatpush2.msra.mxu0 0.0
    %922 = vmatprep.subr.mxu0 0.0
    %923 = vmatpush2.msra.mxu0 0.0
    %924 = vmatprep.subr.mxu0 0.0
    %925 = vmatpush2.msra.mxu0 0.0
    %926 = vmatprep.subr.mxu0 0.0
    %927 = vmatpush2.msra.mxu0 0.0
    %928 = vmatprep.subr.mxu0 0.0
    %929 = vmatpush2.msra.mxu0 0.0
    %930 = vmatprep.subr.mxu0 0.0
    %931 = vmatpush2.msra.mxu0 0.0
    %932 = vmatprep.subr.mxu0 0.0
    %933 = vmatpush2.msra.mxu0 0.0
    %934 = vmatprep.subr.mxu0 0.0
    %935 = vmatpush2.msra.mxu0 0.0
    %936 = vmatprep.subr.mxu0 0.0
    %937 = vmatpush2.msra.mxu0 0.0
    %938 = vmatprep.mubr.f32.mxu0 0.0
    %939 = vmatmul.mubr.f32.gmra.mxu0 %v872
    %v940 = vpop.f32.mrf.mxu0
    %v941 = vadd.f32 0.0, %v940
    %v942 = vpop.f32.mrf.mxu0
    %v943 = vadd.f32 0.0, %v942
    %944 = vdwg.mxu0
    %945 = vmatprep.subr.mxu0 %v323
    %946 = vmatpush1.msra.mxu0 %v322
    %947 = vmatprep.subr.mxu0 %v319
    %948 = vmatpush1.msra.mxu0 %v318
    %949 = vmatprep.subr.mxu0 %v315
    %950 = vmatpush1.msra.mxu0 %v314
    %951 = vmatprep.subr.mxu0 %v311
    %952 = vmatpush1.msra.mxu0 %v310
    %953 = vmatprep.subr.mxu0 %v307
    %954 = vmatpush1.msra.mxu0 %v306
    %955 = vmatprep.subr.mxu0 %v303
    %956 = vmatpush1.msra.mxu0 %v302
    %957 = vmatprep.subr.mxu0 %v299
    %958 = vmatpush1.msra.mxu0 %v298
    %959 = vmatprep.subr.mxu0 %v295
    %960 = vmatpush1.msra.mxu0 %v294
    %961 = vmatprep.subr.mxu0 %v291
    %962 = vmatpush1.msra.mxu0 %v290
    %963 = vmatprep.subr.mxu0 %v287
    %964 = vmatpush1.msra.mxu0 %v286
    %965 = vmatprep.subr.mxu0 %v283
    %966 = vmatpush1.msra.mxu0 %v282
    %967 = vmatprep.subr.mxu0 %v279
    %968 = vmatpush1.msra.mxu0 %v278
    %969 = vmatprep.subr.mxu0 %v275
    %970 = vmatpush1.msra.mxu0 %v274
    %971 = vmatprep.subr.mxu0 %v271
    %972 = vmatpush1.msra.mxu0 %v270
    %973 = vmatprep.subr.mxu0 %v267
    %974 = vmatpush1.msra.mxu0 %v266
    %975 = vmatprep.subr.mxu0 %v263
    %976 = vmatpush1.msra.mxu0 %v262
    %977 = vmatprep.subr.mxu0 0.0
    %978 = vmatpush2.msra.mxu0 0.0
    %979 = vmatprep.subr.mxu0 0.0
    %980 = vmatpush2.msra.mxu0 0.0
    %981 = vmatprep.subr.mxu0 0.0
    %982 = vmatpush2.msra.mxu0 0.0
    %983 = vmatprep.subr.mxu0 0.0
    %984 = vmatpush2.msra.mxu0 0.0
    %985 = vmatprep.subr.mxu0 0.0
    %986 = vmatpush2.msra.mxu0 0.0
    %987 = vmatprep.subr.mxu0 0.0
    %988 = vmatpush2.msra.mxu0 0.0
    %989 = vmatprep.subr.mxu0 0.0
    %990 = vmatpush2.msra.mxu0 0.0
    %991 = vmatprep.subr.mxu0 0.0
    %992 = vmatpush2.msra.mxu0 0.0
    %993 = vmatprep.subr.mxu0 0.0
    %994 = vmatpush2.msra.mxu0 0.0
    %995 = vmatprep.subr.mxu0 0.0
    %996 = vmatpush2.msra.mxu0 0.0
    %997 = vmatprep.subr.mxu0 0.0
    %998 = vmatpush2.msra.mxu0 0.0
    %999 = vmatprep.subr.mxu0 0.0
    %1000 = vmatpush2.msra.mxu0 0.0
    %1001 = vmatprep.subr.mxu0 0.0
    %1002 = vmatpush2.msra.mxu0 0.0
    %1003 = vmatprep.subr.mxu0 0.0
    %1004 = vmatpush2.msra.mxu0 0.0
    %1005 = vmatprep.subr.mxu0 0.0
    %1006 = vmatpush2.msra.mxu0 0.0
    %1007 = vmatprep.subr.mxu0 0.0
    %1008 = vmatpush2.msra.mxu0 0.0
    %1009 = vmatprep.mubr.f32.mxu0 0.0
    %1010 = vmatmul.mubr.f32.gmra.mxu0 %v872
    %v1011 = vpop.f32.mrf.mxu0
    %v1012 = vadd.f32 0.0, %v1011
    %v1013 = vpop.f32.mrf.mxu0
    %v1014 = vadd.f32 0.0, %v1013
    %1015 = vdwg.mxu0
    %v1020 = vrot.slane %v941, 5
    %v1021 = vrot.slane %v943, 5
    %v1022 = vrot.slane %v1012, 5
    %v1023 = vrot.slane %v1014, 5
    %v1028 = vadd.f32 %v185, %v1020
    %v1029 = vadd.f32 %v187, %v1021
    %v1030 = vadd.f32 %v256, %v1022
    %v1031 = vadd.f32 %v258, %v1023
    %v1032 = vxor.u32 %v1028, 2147483648
    %v1033 = vxor.u32 %v1029, 2147483648
    %v1034 = vxor.u32 %v1030, 2147483648
    %v1035 = vmul.f32 %v1032, 1.442695
    %v1036 = vpow.pop %v1035
    %v1037 = vmul.f32 %v1033, 1.442695
    %v1038 = vpow.pop %v1037
    %v1039 = vmul.f32 %v1034, 1.442695
    %v1040 = vpow.pop %v1039
    %v1041 = vadd.f32 %v1036, 1.0
    %v1042 = vadd.f32 %v1038, 1.0
    %v1043 = vadd.f32 %v1040, 1.0
    %v1044 = vrcp.pop %v1041
    %v1045 = vmul.f32 1.0, %v1044
    %v1046 = vrcp.pop %v1042
    %v1047 = vmul.f32 1.0, %v1046
    %v1048 = vrcp.pop %v1043
    %v1049 = vmul.f32 1.0, %v1048
    %v1050 = vtanh.pop %v1031
    %v1052 = vrot.slane %v868, 7
    %v1054 = vmul.f32 %v1047, %v1052
    %v1055 = vmul.f32 %v1045, %v1050
    %v1056 = vadd.f32 %v1054, %v1055
    %v1057 = vtanh.pop %v1056
    %v1058 = vmul.f32 %v1049, %v1057
    %v1060 = vrot.slane %v1058, 3
    %1062 = vmatprep.subr.mxu0 %v321
    %1063 = vmatpush1.msra.mxu0 %v320
    %1064 = vmatprep.subr.mxu0 %v317
    %1065 = vmatpush1.msra.mxu0 %v316
    %1066 = vmatprep.subr.mxu0 %v313
    %1067 = vmatpush1.msra.mxu0 %v312
    %1068 = vmatprep.subr.mxu0 %v309
    %1069 = vmatpush1.msra.mxu0 %v308
    %1070 = vmatprep.subr.mxu0 %v305
    %1071 = vmatpush1.msra.mxu0 %v304
    %1072 = vmatprep.subr.mxu0 %v301
    %1073 = vmatpush1.msra.mxu0 %v300
    %1074 = vmatprep.subr.mxu0 %v297
    %1075 = vmatpush1.msra.mxu0 %v296
    %1076 = vmatprep.subr.mxu0 %v293
    %1077 = vmatpush1.msra.mxu0 %v292
    %1078 = vmatprep.subr.mxu0 %v289
    %1079 = vmatpush1.msra.mxu0 %v288
    %1080 = vmatprep.subr.mxu0 %v285
    %1081 = vmatpush1.msra.mxu0 %v284
    %1082 = vmatprep.subr.mxu0 %v281
    %1083 = vmatpush1.msra.mxu0 %v280
    %1084 = vmatprep.subr.mxu0 %v277
    %1085 = vmatpush1.msra.mxu0 %v276
    %1086 = vmatprep.subr.mxu0 %v273
    %1087 = vmatpush1.msra.mxu0 %v272
    %1088 = vmatprep.subr.mxu0 %v269
    %1089 = vmatpush1.msra.mxu0 %v268
    %1090 = vmatprep.subr.mxu0 %v265
    %1091 = vmatpush1.msra.mxu0 %v264
    %1092 = vmatprep.subr.mxu0 %v261
    %1093 = vmatpush1.msra.mxu0 %v260
    %1094 = vmatprep.subr.mxu0 0.0
    %1095 = vmatpush2.msra.mxu0 0.0
    %1096 = vmatprep.subr.mxu0 0.0
    %1097 = vmatpush2.msra.mxu0 0.0
    %1098 = vmatprep.subr.mxu0 0.0
    %1099 = vmatpush2.msra.mxu0 0.0
    %1100 = vmatprep.subr.mxu0 0.0
    %1101 = vmatpush2.msra.mxu0 0.0
    %1102 = vmatprep.subr.mxu0 0.0
    %1103 = vmatpush2.msra.mxu0 0.0
    %1104 = vmatprep.subr.mxu0 0.0
    %1105 = vmatpush2.msra.mxu0 0.0
    %1106 = vmatprep.subr.mxu0 0.0
    %1107 = vmatpush2.msra.mxu0 0.0
    %1108 = vmatprep.subr.mxu0 0.0
    %1109 = vmatpush2.msra.mxu0 0.0
    %1110 = vmatprep.subr.mxu0 0.0
    %1111 = vmatpush2.msra.mxu0 0.0
    %1112 = vmatprep.subr.mxu0 0.0
    %1113 = vmatpush2.msra.mxu0 0.0
    %1114 = vmatprep.subr.mxu0 0.0
    %1115 = vmatpush2.msra.mxu0 0.0
    %1116 = vmatprep.subr.mxu0 0.0
    %1117 = vmatpush2.msra.mxu0 0.0
    %1118 = vmatprep.subr.mxu0 0.0
    %1119 = vmatpush2.msra.mxu0 0.0
    %1120 = vmatprep.subr.mxu0 0.0
    %1121 = vmatpush2.msra.mxu0 0.0
    %1122 = vmatprep.subr.mxu0 0.0
    %1123 = vmatpush2.msra.mxu0 0.0
    %1124 = vmatprep.subr.mxu0 0.0
    %1125 = vmatpush2.msra.mxu0 0.0
    %1126 = vmatprep.mubr.f32.mxu0 0.0
    %1127 = vmatmul.mubr.f32.gmra.mxu0 %v1060
    %v1128 = vpop.f32.mrf.mxu0
    %v1129 = vadd.f32 0.0, %v1128
    %v1130 = vpop.f32.mrf.mxu0
    %v1131 = vadd.f32 0.0, %v1130
    %1132 = vdwg.mxu0
    %1133 = vmatprep.subr.mxu0 %v323
    %1134 = vmatpush1.msra.mxu0 %v322
    %1135 = vmatprep.subr.mxu0 %v319
    %1136 = vmatpush1.msra.mxu0 %v318
    %1137 = vmatprep.subr.mxu0 %v315
    %1138 = vmatpush1.msra.mxu0 %v314
    %1139 = vmatprep.subr.mxu0 %v311
    %1140 = vmatpush1.msra.mxu0 %v310
    %1141 = vmatprep.subr.mxu0 %v307
    %1142 = vmatpush1.msra.mxu0 %v306
    %1143 = vmatprep.subr.mxu0 %v303
    %1144 = vmatpush1.msra.mxu0 %v302
    %1145 = vmatprep.subr.mxu0 %v299
    %1146 = vmatpush1.msra.mxu0 %v298
    %1147 = vmatprep.subr.mxu0 %v295
    %1148 = vmatpush1.msra.mxu0 %v294
    %1149 = vmatprep.subr.mxu0 %v291
    %1150 = vmatpush1.msra.mxu0 %v290
    %1151 = vmatprep.subr.mxu0 %v287
    %1152 = vmatpush1.msra.mxu0 %v286
    %1153 = vmatprep.subr.mxu0 %v283
    %1154 = vmatpush1.msra.mxu0 %v282
    %1155 = vmatprep.subr.mxu0 %v279
    %1156 = vmatpush1.msra.mxu0 %v278
    %1157 = vmatprep.subr.mxu0 %v275
    %1158 = vmatpush1.msra.mxu0 %v274
    %1159 = vmatprep.subr.mxu0 %v271
    %1160 = vmatpush1.msra.mxu0 %v270
    %1161 = vmatprep.subr.mxu0 %v267
    %1162 = vmatpush1.msra.mxu0 %v266
    %1163 = vmatprep.subr.mxu0 %v263
    %1164 = vmatpush1.msra.mxu0 %v262
    %1165 = vmatprep.subr.mxu0 0.0
    %1166 = vmatpush2.msra.mxu0 0.0
    %1167 = vmatprep.subr.mxu0 0.0
    %1168 = vmatpush2.msra.mxu0 0.0
    %1169 = vmatprep.subr.mxu0 0.0
    %1170 = vmatpush2.msra.mxu0 0.0
    %1171 = vmatprep.subr.mxu0 0.0
    %1172 = vmatpush2.msra.mxu0 0.0
    %1173 = vmatprep.subr.mxu0 0.0
    %1174 = vmatpush2.msra.mxu0 0.0
    %1175 = vmatprep.subr.mxu0 0.0
    %1176 = vmatpush2.msra.mxu0 0.0
    %1177 = vmatprep.subr.mxu0 0.0
    %1178 = vmatpush2.msra.mxu0 0.0
    %1179 = vmatprep.subr.mxu0 0.0
    %1180 = vmatpush2.msra.mxu0 0.0
    %1181 = vmatprep.subr.mxu0 0.0
    %1182 = vmatpush2.msra.mxu0 0.0
    %1183 = vmatprep.subr.mxu0 0.0
    %1184 = vmatpush2.msra.mxu0 0.0
    %1185 = vmatprep.subr.mxu0 0.0
    %1186 = vmatpush2.msra.mxu0 0.0
    %1187 = vmatprep.subr.mxu0 0.0
    %1188 = vmatpush2.msra.mxu0 0.0
    %1189 = vmatprep.subr.mxu0 0.0
    %1190 = vmatpush2.msra.mxu0 0.0
    %1191 = vmatprep.subr.mxu0 0.0
    %1192 = vmatpush2.msra.mxu0 0.0
    %1193 = vmatprep.subr.mxu0 0.0
    %1194 = vmatpush2.msra.mxu0 0.0
    %1195 = vmatprep.subr.mxu0 0.0
    %1196 = vmatpush2.msra.mxu0 0.0
    %1197 = vmatprep.mubr.f32.mxu0 0.0
    %1198 = vmatmul.mubr.f32.gmra.mxu0 %v1060
    %v1199 = vpop.f32.mrf.mxu0
    %v1200 = vadd.f32 0.0, %v1199
    %v1201 = vpop.f32.mrf.mxu0
    %v1202 = vadd.f32 0.0, %v1201
    %1203 = vdwg.mxu0
    %v1208 = vrot.slane %v1129, 4
    %v1209 = vrot.slane %v1131, 4
    %v1210 = vrot.slane %v1200, 4
    %v1211 = vrot.slane %v1202, 4
    %v1216 = vadd.f32 %v185, %v1208
    %v1217 = vadd.f32 %v187, %v1209
    %v1218 = vadd.f32 %v256, %v1210
    %v1219 = vadd.f32 %v258, %v1211
    %v1220 = vxor.u32 %v1216, 2147483648
    %v1221 = vxor.u32 %v1217, 2147483648
    %v1222 = vxor.u32 %v1218, 2147483648
    %v1223 = vmul.f32 %v1220, 1.442695
    %v1224 = vpow.pop %v1223
    %v1225 = vmul.f32 %v1221, 1.442695
    %v1226 = vpow.pop %v1225
    %v1227 = vmul.f32 %v1222, 1.442695
    %v1228 = vpow.pop %v1227
    %v1229 = vadd.f32 %v1224, 1.0
    %v1230 = vadd.f32 %v1226, 1.0
    %v1231 = vadd.f32 %v1228, 1.0
    %v1232 = vrcp.pop %v1229
    %v1233 = vmul.f32 1.0, %v1232
    %v1234 = vrcp.pop %v1230
    %v1235 = vmul.f32 1.0, %v1234
    %v1236 = vrcp.pop %v1231
    %v1237 = vmul.f32 1.0, %v1236
    %v1238 = vtanh.pop %v1219
    %v1240 = vrot.slane %v1056, 7
    %v1242 = vmul.f32 %v1235, %v1240
    %v1243 = vmul.f32 %v1233, %v1238
    %v1244 = vadd.f32 %v1242, %v1243
    %v1245 = vtanh.pop %v1244
    %v1246 = vmul.f32 %v1237, %v1245
    %v1248 = vrot.slane %v1246, 4
    %1250 = vmatprep.subr.mxu0 %v321
    %1251 = vmatpush1.msra.mxu0 %v320
    %1252 = vmatprep.subr.mxu0 %v317
    %1253 = vmatpush1.msra.mxu0 %v316
    %1254 = vmatprep.subr.mxu0 %v313
    %1255 = vmatpush1.msra.mxu0 %v312
    %1256 = vmatprep.subr.mxu0 %v309
    %1257 = vmatpush1.msra.mxu0 %v308
    %1258 = vmatprep.subr.mxu0 %v305
    %1259 = vmatpush1.msra.mxu0 %v304
    %1260 = vmatprep.subr.mxu0 %v301
    %1261 = vmatpush1.msra.mxu0 %v300
    %1262 = vmatprep.subr.mxu0 %v297
    %1263 = vmatpush1.msra.mxu0 %v296
    %1264 = vmatprep.subr.mxu0 %v293
    %1265 = vmatpush1.msra.mxu0 %v292
    %1266 = vmatprep.subr.mxu0 %v289
    %1267 = vmatpush1.msra.mxu0 %v288
    %1268 = vmatprep.subr.mxu0 %v285
    %1269 = vmatpush1.msra.mxu0 %v284
    %1270 = vmatprep.subr.mxu0 %v281
    %1271 = vmatpush1.msra.mxu0 %v280
    %1272 = vmatprep.subr.mxu0 %v277
    %1273 = vmatpush1.msra.mxu0 %v276
    %1274 = vmatprep.subr.mxu0 %v273
    %1275 = vmatpush1.msra.mxu0 %v272
    %1276 = vmatprep.subr.mxu0 %v269
    %1277 = vmatpush1.msra.mxu0 %v268
    %1278 = vmatprep.subr.mxu0 %v265
    %1279 = vmatpush1.msra.mxu0 %v264
    %1280 = vmatprep.subr.mxu0 %v261
    %1281 = vmatpush1.msra.mxu0 %v260
    %1282 = vmatprep.subr.mxu0 0.0
    %1283 = vmatpush2.msra.mxu0 0.0
    %1284 = vmatprep.subr.mxu0 0.0
    %1285 = vmatpush2.msra.mxu0 0.0
    %1286 = vmatprep.subr.mxu0 0.0
    %1287 = vmatpush2.msra.mxu0 0.0
    %1288 = vmatprep.subr.mxu0 0.0
    %1289 = vmatpush2.msra.mxu0 0.0
    %1290 = vmatprep.subr.mxu0 0.0
    %1291 = vmatpush2.msra.mxu0 0.0
    %1292 = vmatprep.subr.mxu0 0.0
    %1293 = vmatpush2.msra.mxu0 0.0
    %1294 = vmatprep.subr.mxu0 0.0
    %1295 = vmatpush2.msra.mxu0 0.0
    %1296 = vmatprep.subr.mxu0 0.0
    %1297 = vmatpush2.msra.mxu0 0.0
    %1298 = vmatprep.subr.mxu0 0.0
    %1299 = vmatpush2.msra.mxu0 0.0
    %1300 = vmatprep.subr.mxu0 0.0
    %1301 = vmatpush2.msra.mxu0 0.0
    %1302 = vmatprep.subr.mxu0 0.0
    %1303 = vmatpush2.msra.mxu0 0.0
    %1304 = vmatprep.subr.mxu0 0.0
    %1305 = vmatpush2.msra.mxu0 0.0
    %1306 = vmatprep.subr.mxu0 0.0
    %1307 = vmatpush2.msra.mxu0 0.0
    %1308 = vmatprep.subr.mxu0 0.0
    %1309 = vmatpush2.msra.mxu0 0.0
    %1310 = vmatprep.subr.mxu0 0.0
    %1311 = vmatpush2.msra.mxu0 0.0
    %1312 = vmatprep.subr.mxu0 0.0
    %1313 = vmatpush2.msra.mxu0 0.0
    %1314 = vmatprep.mubr.f32.mxu0 0.0
    %1315 = vmatmul.mubr.f32.gmra.mxu0 %v1248
    %v1316 = vpop.f32.mrf.mxu0
    %v1317 = vadd.f32 0.0, %v1316
    %v1318 = vpop.f32.mrf.mxu0
    %v1319 = vadd.f32 0.0, %v1318
    %1320 = vdwg.mxu0
    %1321 = vmatprep.subr.mxu0 %v323
    %1322 = vmatpush1.msra.mxu0 %v322
    %1323 = vmatprep.subr.mxu0 %v319
    %1324 = vmatpush1.msra.mxu0 %v318
    %1325 = vmatprep.subr.mxu0 %v315
    %1326 = vmatpush1.msra.mxu0 %v314
    %1327 = vmatprep.subr.mxu0 %v311
    %1328 = vmatpush1.msra.mxu0 %v310
    %1329 = vmatprep.subr.mxu0 %v307
    %1330 = vmatpush1.msra.mxu0 %v306
    %1331 = vmatprep.subr.mxu0 %v303
    %1332 = vmatpush1.msra.mxu0 %v302
    %1333 = vmatprep.subr.mxu0 %v299
    %1334 = vmatpush1.msra.mxu0 %v298
    %1335 = vmatprep.subr.mxu0 %v295
    %1336 = vmatpush1.msra.mxu0 %v294
    %1337 = vmatprep.subr.mxu0 %v291
    %1338 = vmatpush1.msra.mxu0 %v290
    %1339 = vmatprep.subr.mxu0 %v287
    %1340 = vmatpush1.msra.mxu0 %v286
    %1341 = vmatprep.subr.mxu0 %v283
    %1342 = vmatpush1.msra.mxu0 %v282
    %1343 = vmatprep.subr.mxu0 %v279
    %1344 = vmatpush1.msra.mxu0 %v278
    %1345 = vmatprep.subr.mxu0 %v275
    %1346 = vmatpush1.msra.mxu0 %v274
    %1347 = vmatprep.subr.mxu0 %v271
    %1348 = vmatpush1.msra.mxu0 %v270
    %1349 = vmatprep.subr.mxu0 %v267
    %1350 = vmatpush1.msra.mxu0 %v266
    %1351 = vmatprep.subr.mxu0 %v263
    %1352 = vmatpush1.msra.mxu0 %v262
    %1353 = vmatprep.subr.mxu0 0.0
    %1354 = vmatpush2.msra.mxu0 0.0
    %1355 = vmatprep.subr.mxu0 0.0
    %1356 = vmatpush2.msra.mxu0 0.0
    %1357 = vmatprep.subr.mxu0 0.0
    %1358 = vmatpush2.msra.mxu0 0.0
    %1359 = vmatprep.subr.mxu0 0.0
    %1360 = vmatpush2.msra.mxu0 0.0
    %1361 = vmatprep.subr.mxu0 0.0
    %1362 = vmatpush2.msra.mxu0 0.0
    %1363 = vmatprep.subr.mxu0 0.0
    %1364 = vmatpush2.msra.mxu0 0.0
    %1365 = vmatprep.subr.mxu0 0.0
    %1366 = vmatpush2.msra.mxu0 0.0
    %1367 = vmatprep.subr.mxu0 0.0
    %1368 = vmatpush2.msra.mxu0 0.0
    %1369 = vmatprep.subr.mxu0 0.0
    %1370 = vmatpush2.msra.mxu0 0.0
    %1371 = vmatprep.subr.mxu0 0.0
    %1372 = vmatpush2.msra.mxu0 0.0
    %1373 = vmatprep.subr.mxu0 0.0
    %1374 = vmatpush2.msra.mxu0 0.0
    %1375 = vmatprep.subr.mxu0 0.0
    %1376 = vmatpush2.msra.mxu0 0.0
    %1377 = vmatprep.subr.mxu0 0.0
    %1378 = vmatpush2.msra.mxu0 0.0
    %1379 = vmatprep.subr.mxu0 0.0
    %1380 = vmatpush2.msra.mxu0 0.0
    %1381 = vmatprep.subr.mxu0 0.0
    %1382 = vmatpush2.msra.mxu0 0.0
    %1383 = vmatprep.subr.mxu0 0.0
    %1384 = vmatpush2.msra.mxu0 0.0
    %1385 = vmatprep.mubr.f32.mxu0 0.0
    %1386 = vmatmul.mubr.f32.gmra.mxu0 %v1248
    %v1387 = vpop.f32.mrf.mxu0
    %v1388 = vadd.f32 0.0, %v1387
    %v1389 = vpop.f32.mrf.mxu0
    %v1390 = vadd.f32 0.0, %v1389
    %1391 = vdwg.mxu0
    %v1396 = vrot.slane %v1317, 3
    %v1397 = vrot.slane %v1319, 3
    %v1398 = vrot.slane %v1388, 3
    %v1399 = vrot.slane %v1390, 3
    %v1404 = vadd.f32 %v185, %v1396
    %v1405 = vadd.f32 %v187, %v1397
    %v1406 = vadd.f32 %v256, %v1398
    %v1407 = vadd.f32 %v258, %v1399
    %v1408 = vxor.u32 %v1404, 2147483648
    %v1409 = vxor.u32 %v1405, 2147483648
    %v1410 = vxor.u32 %v1406, 2147483648
    %v1411 = vmul.f32 %v1408, 1.442695
    %v1412 = vpow.pop %v1411
    %v1413 = vmul.f32 %v1409, 1.442695
    %v1414 = vpow.pop %v1413
    %v1415 = vmul.f32 %v1410, 1.442695
    %v1416 = vpow.pop %v1415
    %v1417 = vadd.f32 %v1412, 1.0
    %v1418 = vadd.f32 %v1414, 1.0
    %v1419 = vadd.f32 %v1416, 1.0
    %v1420 = vrcp.pop %v1417
    %v1421 = vmul.f32 1.0, %v1420
    %v1422 = vrcp.pop %v1418
    %v1423 = vmul.f32 1.0, %v1422
    %v1424 = vrcp.pop %v1419
    %v1425 = vmul.f32 1.0, %v1424
    %v1426 = vtanh.pop %v1407
    %v1428 = vrot.slane %v1244, 7
    %v1430 = vmul.f32 %v1423, %v1428
    %v1431 = vmul.f32 %v1421, %v1426
    %v1432 = vadd.f32 %v1430, %v1431
    %v1433 = vtanh.pop %v1432
    %v1434 = vmul.f32 %v1425, %v1433
    %v1436 = vrot.slane %v1434, 5
    %1438 = vmatprep.subr.mxu0 %v321
    %1439 = vmatpush1.msra.mxu0 %v320
    %1440 = vmatprep.subr.mxu0 %v317
    %1441 = vmatpush1.msra.mxu0 %v316
    %1442 = vmatprep.subr.mxu0 %v313
    %1443 = vmatpush1.msra.mxu0 %v312
    %1444 = vmatprep.subr.mxu0 %v309
    %1445 = vmatpush1.msra.mxu0 %v308
    %1446 = vmatprep.subr.mxu0 %v305
    %1447 = vmatpush1.msra.mxu0 %v304
    %1448 = vmatprep.subr.mxu0 %v301
    %1449 = vmatpush1.msra.mxu0 %v300
    %1450 = vmatprep.subr.mxu0 %v297
    %1451 = vmatpush1.msra.mxu0 %v296
    %1452 = vmatprep.subr.mxu0 %v293
    %1453 = vmatpush1.msra.mxu0 %v292
    %1454 = vmatprep.subr.mxu0 %v289
    %1455 = vmatpush1.msra.mxu0 %v288
    %1456 = vmatprep.subr.mxu0 %v285
    %1457 = vmatpush1.msra.mxu0 %v284
    %1458 = vmatprep.subr.mxu0 %v281
    %1459 = vmatpush1.msra.mxu0 %v280
    %1460 = vmatprep.subr.mxu0 %v277
    %1461 = vmatpush1.msra.mxu0 %v276
    %1462 = vmatprep.subr.mxu0 %v273
    %1463 = vmatpush1.msra.mxu0 %v272
    %1464 = vmatprep.subr.mxu0 %v269
    %1465 = vmatpush1.msra.mxu0 %v268
    %1466 = vmatprep.subr.mxu0 %v265
    %1467 = vmatpush1.msra.mxu0 %v264
    %1468 = vmatprep.subr.mxu0 %v261
    %1469 = vmatpush1.msra.mxu0 %v260
    %1470 = vmatprep.subr.mxu0 0.0
    %1471 = vmatpush2.msra.mxu0 0.0
    %1472 = vmatprep.subr.mxu0 0.0
    %1473 = vmatpush2.msra.mxu0 0.0
    %1474 = vmatprep.subr.mxu0 0.0
    %1475 = vmatpush2.msra.mxu0 0.0
    %1476 = vmatprep.subr.mxu0 0.0
    %1477 = vmatpush2.msra.mxu0 0.0
    %1478 = vmatprep.subr.mxu0 0.0
    %1479 = vmatpush2.msra.mxu0 0.0
    %1480 = vmatprep.subr.mxu0 0.0
    %1481 = vmatpush2.msra.mxu0 0.0
    %1482 = vmatprep.subr.mxu0 0.0
    %1483 = vmatpush2.msra.mxu0 0.0
    %1484 = vmatprep.subr.mxu0 0.0
    %1485 = vmatpush2.msra.mxu0 0.0
    %1486 = vmatprep.subr.mxu0 0.0
    %1487 = vmatpush2.msra.mxu0 0.0
    %1488 = vmatprep.subr.mxu0 0.0
    %1489 = vmatpush2.msra.mxu0 0.0
    %1490 = vmatprep.subr.mxu0 0.0
    %1491 = vmatpush2.msra.mxu0 0.0
    %1492 = vmatprep.subr.mxu0 0.0
    %1493 = vmatpush2.msra.mxu0 0.0
    %1494 = vmatprep.subr.mxu0 0.0
    %1495 = vmatpush2.msra.mxu0 0.0
    %1496 = vmatprep.subr.mxu0 0.0
    %1497 = vmatpush2.msra.mxu0 0.0
    %1498 = vmatprep.subr.mxu0 0.0
    %1499 = vmatpush2.msra.mxu0 0.0
    %1500 = vmatprep.subr.mxu0 0.0
    %1501 = vmatpush2.msra.mxu0 0.0
    %1502 = vmatprep.mubr.f32.mxu0 0.0
    %1503 = vmatmul.mubr.f32.gmra.mxu0 %v1436
    %v1504 = vpop.f32.mrf.mxu0
    %v1505 = vadd.f32 0.0, %v1504
    %v1506 = vpop.f32.mrf.mxu0
    %v1507 = vadd.f32 0.0, %v1506
    %1508 = vdwg.mxu0
    %1509 = vmatprep.subr.mxu0 %v323
    %1510 = vmatpush1.msra.mxu0 %v322
    %1511 = vmatprep.subr.mxu0 %v319
    %1512 = vmatpush1.msra.mxu0 %v318
    %1513 = vmatprep.subr.mxu0 %v315
    %1514 = vmatpush1.msra.mxu0 %v314
    %1515 = vmatprep.subr.mxu0 %v311
    %1516 = vmatpush1.msra.mxu0 %v310
    %1517 = vmatprep.subr.mxu0 %v307
    %1518 = vmatpush1.msra.mxu0 %v306
    %1519 = vmatprep.subr.mxu0 %v303
    %1520 = vmatpush1.msra.mxu0 %v302
    %1521 = vmatprep.subr.mxu0 %v299
    %1522 = vmatpush1.msra.mxu0 %v298
    %1523 = vmatprep.subr.mxu0 %v295
    %1524 = vmatpush1.msra.mxu0 %v294
    %1525 = vmatprep.subr.mxu0 %v291
    %1526 = vmatpush1.msra.mxu0 %v290
    %1527 = vmatprep.subr.mxu0 %v287
    %1528 = vmatpush1.msra.mxu0 %v286
    %1529 = vmatprep.subr.mxu0 %v283
    %1530 = vmatpush1.msra.mxu0 %v282
    %1531 = vmatprep.subr.mxu0 %v279
    %1532 = vmatpush1.msra.mxu0 %v278
    %1533 = vmatprep.subr.mxu0 %v275
    %1534 = vmatpush1.msra.mxu0 %v274
    %1535 = vmatprep.subr.mxu0 %v271
    %1536 = vmatpush1.msra.mxu0 %v270
    %1537 = vmatprep.subr.mxu0 %v267
    %1538 = vmatpush1.msra.mxu0 %v266
    %1539 = vmatprep.subr.mxu0 %v263
    %1540 = vmatpush1.msra.mxu0 %v262
    %1541 = vmatprep.subr.mxu0 0.0
    %1542 = vmatpush2.msra.mxu0 0.0
    %1543 = vmatprep.subr.mxu0 0.0
    %1544 = vmatpush2.msra.mxu0 0.0
    %1545 = vmatprep.subr.mxu0 0.0
    %1546 = vmatpush2.msra.mxu0 0.0
    %1547 = vmatprep.subr.mxu0 0.0
    %1548 = vmatpush2.msra.mxu0 0.0
    %1549 = vmatprep.subr.mxu0 0.0
    %1550 = vmatpush2.msra.mxu0 0.0
    %1551 = vmatprep.subr.mxu0 0.0
    %1552 = vmatpush2.msra.mxu0 0.0
    %1553 = vmatprep.subr.mxu0 0.0
    %1554 = vmatpush2.msra.mxu0 0.0
    %1555 = vmatprep.subr.mxu0 0.0
    %1556 = vmatpush2.msra.mxu0 0.0
    %1557 = vmatprep.subr.mxu0 0.0
    %1558 = vmatpush2.msra.mxu0 0.0
    %1559 = vmatprep.subr.mxu0 0.0
    %1560 = vmatpush2.msra.mxu0 0.0
    %1561 = vmatprep.subr.mxu0 0.0
    %1562 = vmatpush2.msra.mxu0 0.0
    %1563 = vmatprep.subr.mxu0 0.0
    %1564 = vmatpush2.msra.mxu0 0.0
    %1565 = vmatprep.subr.mxu0 0.0
    %1566 = vmatpush2.msra.mxu0 0.0
    %1567 = vmatprep.subr.mxu0 0.0
    %1568 = vmatpush2.msra.mxu0 0.0
    %1569 = vmatprep.subr.mxu0 0.0
    %1570 = vmatpush2.msra.mxu0 0.0
    %1571 = vmatprep.subr.mxu0 0.0
    %1572 = vmatpush2.msra.mxu0 0.0
    %1573 = vmatprep.mubr.f32.mxu0 0.0
    %1574 = vmatmul.mubr.f32.gmra.mxu0 %v1436
    %v1575 = vpop.f32.mrf.mxu0
    %v1576 = vadd.f32 0.0, %v1575
    %v1577 = vpop.f32.mrf.mxu0
    %v1578 = vadd.f32 0.0, %v1577
    %1579 = vdwg.mxu0
    %v1584 = vrot.slane %v1505, 2
    %v1585 = vrot.slane %v1507, 2
    %v1586 = vrot.slane %v1576, 2
    %v1587 = vrot.slane %v1578, 2
    %v1592 = vadd.f32 %v185, %v1584
    %v1593 = vadd.f32 %v187, %v1585
    %v1594 = vadd.f32 %v256, %v1586
    %v1595 = vadd.f32 %v258, %v1587
    %v1596 = vxor.u32 %v1592, 2147483648
    %v1597 = vxor.u32 %v1593, 2147483648
    %v1598 = vxor.u32 %v1594, 2147483648
    %v1599 = vmul.f32 %v1596, 1.442695
    %v1600 = vpow.pop %v1599
    %v1601 = vmul.f32 %v1597, 1.442695
    %v1602 = vpow.pop %v1601
    %v1603 = vmul.f32 %v1598, 1.442695
    %v1604 = vpow.pop %v1603
    %v1605 = vadd.f32 %v1600, 1.0
    %v1606 = vadd.f32 %v1602, 1.0
    %v1607 = vadd.f32 %v1604, 1.0
    %v1608 = vrcp.pop %v1605
    %v1609 = vmul.f32 1.0, %v1608
    %v1610 = vrcp.pop %v1606
    %v1611 = vmul.f32 1.0, %v1610
    %v1612 = vrcp.pop %v1607
    %v1613 = vmul.f32 1.0, %v1612
    %v1614 = vtanh.pop %v1595
    %v1616 = vrot.slane %v1432, 7
    %v1618 = vmul.f32 %v1611, %v1616
    %v1619 = vmul.f32 %v1609, %v1614
    %v1620 = vadd.f32 %v1618, %v1619
    %v1621 = vtanh.pop %v1620
    %v1622 = vmul.f32 %v1613, %v1621
    %v1624 = vrot.slane %v1622, 6
    %1626 = vmatprep.subr.mxu0 %v321
    %1627 = vmatpush1.msra.mxu0 %v320
    %1628 = vmatprep.subr.mxu0 %v317
    %1629 = vmatpush1.msra.mxu0 %v316
    %1630 = vmatprep.subr.mxu0 %v313
    %1631 = vmatpush1.msra.mxu0 %v312
    %1632 = vmatprep.subr.mxu0 %v309
    %1633 = vmatpush1.msra.mxu0 %v308
    %1634 = vmatprep.subr.mxu0 %v305
    %1635 = vmatpush1.msra.mxu0 %v304
    %1636 = vmatprep.subr.mxu0 %v301
    %1637 = vmatpush1.msra.mxu0 %v300
    %1638 = vmatprep.subr.mxu0 %v297
    %1639 = vmatpush1.msra.mxu0 %v296
    %1640 = vmatprep.subr.mxu0 %v293
    %1641 = vmatpush1.msra.mxu0 %v292
    %1642 = vmatprep.subr.mxu0 %v289
    %1643 = vmatpush1.msra.mxu0 %v288
    %1644 = vmatprep.subr.mxu0 %v285
    %1645 = vmatpush1.msra.mxu0 %v284
    %1646 = vmatprep.subr.mxu0 %v281
    %1647 = vmatpush1.msra.mxu0 %v280
    %1648 = vmatprep.subr.mxu0 %v277
    %1649 = vmatpush1.msra.mxu0 %v276
    %1650 = vmatprep.subr.mxu0 %v273
    %1651 = vmatpush1.msra.mxu0 %v272
    %1652 = vmatprep.subr.mxu0 %v269
    %1653 = vmatpush1.msra.mxu0 %v268
    %1654 = vmatprep.subr.mxu0 %v265
    %1655 = vmatpush1.msra.mxu0 %v264
    %1656 = vmatprep.subr.mxu0 %v261
    %1657 = vmatpush1.msra.mxu0 %v260
    %1658 = vmatprep.subr.mxu0 0.0
    %1659 = vmatpush2.msra.mxu0 0.0
    %1660 = vmatprep.subr.mxu0 0.0
    %1661 = vmatpush2.msra.mxu0 0.0
    %1662 = vmatprep.subr.mxu0 0.0
    %1663 = vmatpush2.msra.mxu0 0.0
    %1664 = vmatprep.subr.mxu0 0.0
    %1665 = vmatpush2.msra.mxu0 0.0
    %1666 = vmatprep.subr.mxu0 0.0
    %1667 = vmatpush2.msra.mxu0 0.0
    %1668 = vmatprep.subr.mxu0 0.0
    %1669 = vmatpush2.msra.mxu0 0.0
    %1670 = vmatprep.subr.mxu0 0.0
    %1671 = vmatpush2.msra.mxu0 0.0
    %1672 = vmatprep.subr.mxu0 0.0
    %1673 = vmatpush2.msra.mxu0 0.0
    %1674 = vmatprep.subr.mxu0 0.0
    %1675 = vmatpush2.msra.mxu0 0.0
    %1676 = vmatprep.subr.mxu0 0.0
    %1677 = vmatpush2.msra.mxu0 0.0
    %1678 = vmatprep.subr.mxu0 0.0
    %1679 = vmatpush2.msra.mxu0 0.0
    %1680 = vmatprep.subr.mxu0 0.0
    %1681 = vmatpush2.msra.mxu0 0.0
    %1682 = vmatprep.subr.mxu0 0.0
    %1683 = vmatpush2.msra.mxu0 0.0
    %1684 = vmatprep.subr.mxu0 0.0
    %1685 = vmatpush2.msra.mxu0 0.0
    %1686 = vmatprep.subr.mxu0 0.0
    %1687 = vmatpush2.msra.mxu0 0.0
    %1688 = vmatprep.subr.mxu0 0.0
    %1689 = vmatpush2.msra.mxu0 0.0
    %1690 = vmatprep.mubr.f32.mxu0 0.0
    %1691 = vmatmul.mubr.f32.gmra.mxu0 %v1624
    %v1692 = vpop.f32.mrf.mxu0
    %v1693 = vadd.f32 0.0, %v1692
    %v1694 = vpop.f32.mrf.mxu0
    %v1695 = vadd.f32 0.0, %v1694
    %1696 = vdwg.mxu0
    %1697 = vmatprep.subr.mxu0 %v323
    %1698 = vmatpush1.msra.mxu0 %v322
    %1699 = vmatprep.subr.mxu0 %v319
    %1700 = vmatpush1.msra.mxu0 %v318
    %1701 = vmatprep.subr.mxu0 %v315
    %1702 = vmatpush1.msra.mxu0 %v314
    %1703 = vmatprep.subr.mxu0 %v311
    %1704 = vmatpush1.msra.mxu0 %v310
    %1705 = vmatprep.subr.mxu0 %v307
    %1706 = vmatpush1.msra.mxu0 %v306
    %1707 = vmatprep.subr.mxu0 %v303
    %1708 = vmatpush1.msra.mxu0 %v302
    %1709 = vmatprep.subr.mxu0 %v299
    %1710 = vmatpush1.msra.mxu0 %v298
    %1711 = vmatprep.subr.mxu0 %v295
    %1712 = vmatpush1.msra.mxu0 %v294
    %1713 = vmatprep.subr.mxu0 %v291
    %1714 = vmatpush1.msra.mxu0 %v290
    %1715 = vmatprep.subr.mxu0 %v287
    %1716 = vmatpush1.msra.mxu0 %v286
    %1717 = vmatprep.subr.mxu0 %v283
    %1718 = vmatpush1.msra.mxu0 %v282
    %1719 = vmatprep.subr.mxu0 %v279
    %1720 = vmatpush1.msra.mxu0 %v278
    %1721 = vmatprep.subr.mxu0 %v275
    %1722 = vmatpush1.msra.mxu0 %v274
    %1723 = vmatprep.subr.mxu0 %v271
    %1724 = vmatpush1.msra.mxu0 %v270
    %1725 = vmatprep.subr.mxu0 %v267
    %1726 = vmatpush1.msra.mxu0 %v266
    %1727 = vmatprep.subr.mxu0 %v263
    %1728 = vmatpush1.msra.mxu0 %v262
    %1729 = vmatprep.subr.mxu0 0.0
    %1730 = vmatpush2.msra.mxu0 0.0
    %1731 = vmatprep.subr.mxu0 0.0
    %1732 = vmatpush2.msra.mxu0 0.0
    %1733 = vmatprep.subr.mxu0 0.0
    %1734 = vmatpush2.msra.mxu0 0.0
    %1735 = vmatprep.subr.mxu0 0.0
    %1736 = vmatpush2.msra.mxu0 0.0
    %1737 = vmatprep.subr.mxu0 0.0
    %1738 = vmatpush2.msra.mxu0 0.0
    %1739 = vmatprep.subr.mxu0 0.0
    %1740 = vmatpush2.msra.mxu0 0.0
    %1741 = vmatprep.subr.mxu0 0.0
    %1742 = vmatpush2.msra.mxu0 0.0
    %1743 = vmatprep.subr.mxu0 0.0
    %1744 = vmatpush2.msra.mxu0 0.0
    %1745 = vmatprep.subr.mxu0 0.0
    %1746 = vmatpush2.msra.mxu0 0.0
    %1747 = vmatprep.subr.mxu0 0.0
    %1748 = vmatpush2.msra.mxu0 0.0
    %1749 = vmatprep.subr.mxu0 0.0
    %1750 = vmatpush2.msra.mxu0 0.0
    %1751 = vmatprep.subr.mxu0 0.0
    %1752 = vmatpush2.msra.mxu0 0.0
    %1753 = vmatprep.subr.mxu0 0.0
    %1754 = vmatpush2.msra.mxu0 0.0
    %1755 = vmatprep.subr.mxu0 0.0
    %1756 = vmatpush2.msra.mxu0 0.0
    %1757 = vmatprep.subr.mxu0 0.0
    %1758 = vmatpush2.msra.mxu0 0.0
    %1759 = vmatprep.subr.mxu0 0.0
    %1760 = vmatpush2.msra.mxu0 0.0
    %1761 = vmatprep.mubr.f32.mxu0 0.0
    %1762 = vmatmul.mubr.f32.gmra.mxu0 %v1624
    %v1763 = vpop.f32.mrf.mxu0
    %v1764 = vadd.f32 0.0, %v1763
    %v1765 = vpop.f32.mrf.mxu0
    %v1766 = vadd.f32 0.0, %v1765
    %1767 = vdwg.mxu0
    %v1772 = vrot.slane %v1693, 1
    %v1773 = vrot.slane %v1695, 1
    %v1774 = vrot.slane %v1764, 1
    %v1775 = vrot.slane %v1766, 1
    %v1780 = vadd.f32 %v185, %v1772
    %v1781 = vadd.f32 %v187, %v1773
    %v1782 = vadd.f32 %v256, %v1774
    %v1783 = vadd.f32 %v258, %v1775
    %v1784 = vxor.u32 %v1780, 2147483648
    %v1785 = vxor.u32 %v1781, 2147483648
    %v1786 = vxor.u32 %v1782, 2147483648
    %v1787 = vmul.f32 %v1784, 1.442695
    %v1788 = vpow.pop %v1787
    %v1789 = vmul.f32 %v1785, 1.442695
    %v1790 = vpow.pop %v1789
    %v1791 = vmul.f32 %v1786, 1.442695
    %v1792 = vpow.pop %v1791
    %v1793 = vadd.f32 %v1788, 1.0
    %v1794 = vadd.f32 %v1790, 1.0
    %v1795 = vadd.f32 %v1792, 1.0
    %v1796 = vrcp.pop %v1793
    %v1797 = vmul.f32 1.0, %v1796
    %v1798 = vrcp.pop %v1794
    %v1799 = vmul.f32 1.0, %v1798
    %v1800 = vrcp.pop %v1795
    %v1801 = vmul.f32 1.0, %v1800
    %v1802 = vtanh.pop %v1783
    %v1804 = vrot.slane %v1620, 7
    %v1806 = vmul.f32 %v1799, %v1804
    %v1807 = vmul.f32 %v1797, %v1802
    %v1808 = vadd.f32 %v1806, %v1807
    %v1809 = vtanh.pop %v1808
    %v1810 = vmul.f32 %v1801, %v1809
    %v1811 = vld [vmem:[#allocation5] sm:$0x1]
    %v1812 = vld [vmem:[#allocation5 + $0x8] sm:$0xff]
    %v1813 = vld [vmem:[#allocation5 + $0x10] sm:$0xff]
    %v1814 = vld [vmem:[#allocation5 + $0x18] sm:$0xff]
    %v1815 = vld [vmem:[#allocation5 + $0x20] sm:$0xff]
    %v1816 = vld [vmem:[#allocation5 + $0x28] sm:$0xff]
    %v1817 = vld [vmem:[#allocation5 + $0x30] sm:$0xff]
    %v1818 = vld [vmem:[#allocation5 + $0x38] sm:$0xff]
    %v1819 = vld [vmem:[#allocation5 + $0x40] sm:$0xff]
    %v1820 = vld [vmem:[#allocation5 + $0x48] sm:$0xff]
    %v1821 = vld [vmem:[#allocation5 + $0x50] sm:$0xff]
    %v1822 = vld [vmem:[#allocation5 + $0x58] sm:$0xff]
    %v1823 = vld [vmem:[#allocation5 + $0x60] sm:$0xff]
    %v1824 = vld [vmem:[#allocation5 + $0x68] sm:$0xff]
    %v1825 = vld [vmem:[#allocation5 + $0x70] sm:$0xff]
    %v1826 = vld [vmem:[#allocation5 + $0x78] sm:$0xff]
    %v1827 = vld [vmem:[#allocation5 + $0x80] sm:$0xff]
    %v1829 = vrot.slane %v1810, 7
    %1831 = vmatprep.subr.mxu0 0.0
    %1832 = vmatpush1.msra.mxu0 %v1827
    %1833 = vmatprep.subr.mxu0 0.0
    %1834 = vmatpush1.msra.mxu0 %v1826
    %1835 = vmatprep.subr.mxu0 0.0
    %1836 = vmatpush1.msra.mxu0 %v1825
    %1837 = vmatprep.subr.mxu0 0.0
    %1838 = vmatpush1.msra.mxu0 %v1824
    %1839 = vmatprep.subr.mxu0 0.0
    %1840 = vmatpush1.msra.mxu0 %v1823
    %1841 = vmatprep.subr.mxu0 0.0
    %1842 = vmatpush1.msra.mxu0 %v1822
    %1843 = vmatprep.subr.mxu0 0.0
    %1844 = vmatpush1.msra.mxu0 %v1821
    %1845 = vmatprep.subr.mxu0 0.0
    %1846 = vmatpush1.msra.mxu0 %v1820
    %1847 = vmatprep.subr.mxu0 0.0
    %1848 = vmatpush1.msra.mxu0 %v1819
    %1849 = vmatprep.subr.mxu0 0.0
    %1850 = vmatpush1.msra.mxu0 %v1818
    %1851 = vmatprep.subr.mxu0 0.0
    %1852 = vmatpush1.msra.mxu0 %v1817
    %1853 = vmatprep.subr.mxu0 0.0
    %1854 = vmatpush1.msra.mxu0 %v1816
    %1855 = vmatprep.subr.mxu0 0.0
    %1856 = vmatpush1.msra.mxu0 %v1815
    %1857 = vmatprep.subr.mxu0 0.0
    %1858 = vmatpush1.msra.mxu0 %v1814
    %1859 = vmatprep.subr.mxu0 0.0
    %1860 = vmatpush1.msra.mxu0 %v1813
    %1861 = vmatprep.subr.mxu0 0.0
    %1862 = vmatpush1.msra.mxu0 %v1812
    %1863 = vmatprep.subr.mxu0 0.0
    %1864 = vmatpush2.msra.mxu0 0.0
    %1865 = vmatprep.subr.mxu0 0.0
    %1866 = vmatpush2.msra.mxu0 0.0
    %1867 = vmatprep.subr.mxu0 0.0
    %1868 = vmatpush2.msra.mxu0 0.0
    %1869 = vmatprep.subr.mxu0 0.0
    %1870 = vmatpush2.msra.mxu0 0.0
    %1871 = vmatprep.subr.mxu0 0.0
    %1872 = vmatpush2.msra.mxu0 0.0
    %1873 = vmatprep.subr.mxu0 0.0
    %1874 = vmatpush2.msra.mxu0 0.0
    %1875 = vmatprep.subr.mxu0 0.0
    %1876 = vmatpush2.msra.mxu0 0.0
    %1877 = vmatprep.subr.mxu0 0.0
    %1878 = vmatpush2.msra.mxu0 0.0
    %1879 = vmatprep.subr.mxu0 0.0
    %1880 = vmatpush2.msra.mxu0 0.0
    %1881 = vmatprep.subr.mxu0 0.0
    %1882 = vmatpush2.msra.mxu0 0.0
    %1883 = vmatprep.subr.mxu0 0.0
    %1884 = vmatpush2.msra.mxu0 0.0
    %1885 = vmatprep.subr.mxu0 0.0
    %1886 = vmatpush2.msra.mxu0 0.0
    %1887 = vmatprep.subr.mxu0 0.0
    %1888 = vmatpush2.msra.mxu0 0.0
    %1889 = vmatprep.subr.mxu0 0.0
    %1890 = vmatpush2.msra.mxu0 0.0
    %1891 = vmatprep.subr.mxu0 0.0
    %1892 = vmatpush2.msra.mxu0 0.0
    %1893 = vmatprep.subr.mxu0 0.0
    %1894 = vmatpush2.msra.mxu0 0.0
    %1895 = vmatprep.mubr.f32.mxu0 0.0
    %1896 = vmatmul.mubr.f32.gmra.mxu0 %v1829
    %v1897 = vpop.f32.mrf.mxu0
    %v1898 = vadd.f32 %v1811, %v1897
    %v1899 = vpop.f32.mrf.mxu0
    %1900 = vdwg.mxu0
    %vm1901 = vcmask 1040384
    %v1902 = vsel %vm1901, %v1898, -inf
    %1903 = vmax.xlane.f32.xlu0 %v1902
    %v1904 = vpop.xlane.xlu0 %1903
    %v1905 = vsub.f32 %v1898, %v1904
    %v1906 = vmul.f32 %v1905, 1.442695
    %v1907 = vpow.pop %v1906
    %v1908 = vsel %vm1901, %v1907, 0.0
    %1909 = vadd.xlane.f32.xlu0 %v1908
    %v1910 = vpop.xlane.xlu0 %1909
    %v1911 = vlog2.pop %v1910
    %v1912 = vmul.f32 %v1911, 0.6931472
    %v1913 = vsub.f32 %v1905, %v1912
    %1914 = vst [vmem:[#allocation7] sm:$0x1] %v1913
    // Predicated region
    $region26: #{tpu_custom_call.1} parent=1 // pred_check
      _
    $region27: #{tpu_custom_call.1} parent=1 // pred_check_branch
      %1916 = sbr.rel (0) target = $region29
    $region28: #{tpu_custom_call.1} parent=1 // pred_region
      %s1918 = ssub.s32 16, 16
      %1919 = vsyncadd [#allocation4], %s1918
      %s1921 = sshll.u32 [#allocation7], 4
      %s1922 = int_to_ptr.vmem [resolvable:$true] %s1921
      %1924 = dma.vmem_to_hbm [thread:$0]  %s1922, 16, %s4, [#allocation4]
    $region29: #{tpu_custom_call.1} parent=1 // pred_fallthru
      _
    // Predicated region
    $region30: #{tpu_custom_call.1} parent=1 // pred_check
      _
    $region31: #{tpu_custom_call.1} parent=1 // pred_check_branch
      %1926 = sbr.rel (0) target = $region33
    $region32: #{tpu_custom_call.1} parent=1 // pred_region
      %1927 = dma.done [#allocation4], 16
    $region33: #{tpu_custom_call.1} parent=1 // pred_fallthru
      _
    %1928 = vsyncpa [#allocation3], 1
    %1929 = vsyncpa [#allocation6], 1
    %1930 = vsyncpa [#allocation4], 1

</llo_original>
